<compile_context>
chip_gen: v7x
topology: tpu7x:2x2x1
jax: 0.10.0
libtpu: 0.0.40
codegen_flags: <defaults>
</compile_context>

<pallas_src>
import jax
import jax.numpy as jnp
from jax.experimental import pallas as pl
from jax.experimental.pallas import tpu as pltpu

IN_FEATURES = 1024
OUT_FEATURES = 1000
LANE = 128


def linear_kernel(x_ref, w_ref, b_ref, o_ref):
    # One MXU matmul over the full K, bias add, single lane-dense store.
    o_ref[...] = (
        jnp.dot(x_ref[...], w_ref[...], preferred_element_type=jnp.float32)
        + b_ref[...]
    ).astype(o_ref.dtype)


def linear_pallas(x, w_t, b):
    """x: [B, K], w_t: [K, N] (already transposed), b: [N] -> [B, N]."""
    B, K = x.shape
    K2, N = w_t.shape
    assert K == K2

    # Pad N up to a multiple of 128 for lane-dense stores (glue, outside kernel).
    n_pad = (-N) % LANE
    Np = N + n_pad
    w_t_p = jnp.pad(w_t, ((0, 0), (0, n_pad)))
    b_p = jnp.pad(b, ((0, n_pad),)).reshape(1, Np)

    out_p = pl.pallas_call(
        linear_kernel,
        out_shape=jax.ShapeDtypeStruct((B, Np), x.dtype),
        grid=(1,),
        in_specs=[
            pl.BlockSpec((B, K), lambda i: (0, 0)),    # x  (full, resident)
            pl.BlockSpec((K, Np), lambda i: (0, 0)),   # W_t (full, resident)
            pl.BlockSpec((1, Np), lambda i: (0, 0)),   # bias (resident)
        ],
        out_specs=pl.BlockSpec((B, Np), lambda i: (0, 0)),
        compiler_params=pltpu.CompilerParams(
            dimension_semantics=("arbitrary",),
        ),
    )(x, w_t_p, b_p)

    # Strip the lane padding back to the true output width.
    return out_p[:, :N]


if __name__ == "__main__":
    key = jax.random.PRNGKey(0)
    kx, kw, kb = jax.random.split(key, 3)

    # Input matches the module's forward: x583 of shape [1, 1024].
    x = jax.random.normal(kx, (1, IN_FEATURES), dtype=jnp.float32)

    # Deterministic parameter init (PyTorch Linear default is uniform in
    # [-1/sqrt(fan_in), 1/sqrt(fan_in)]); shapes match Linear(1024, 1000).
    bound = 1.0 / (IN_FEATURES ** 0.5)
    w = jax.random.uniform(
        kw, (OUT_FEATURES, IN_FEATURES), dtype=jnp.float32,
        minval=-bound, maxval=bound)
    b = jax.random.uniform(
        kb, (OUT_FEATURES,), dtype=jnp.float32, minval=-bound, maxval=bound)

    # Pre-transpose weight in plain JAX (glue); kernel consumes [K, N].
    w_t = w.T

    out = linear_pallas(x, w_t, b)
    jax.block_until_ready(out)

    # Reference check against plain JAX.
    ref = x @ w.T + b
    assert out.shape == (1, OUT_FEATURES)
    assert jnp.allclose(out, ref, atol=1e-4, rtol=1e-4)

    print("KERNEL_OK")
</pallas_src>

<mosaic_0001>
module attributes {stable_mosaic.version = 11 : i64} {
  func.func @linear_kernel(%arg0: i32, %arg1: memref<1x1024xf32, #tpu.memory_space<vmem>>, %arg2: memref<1024x1024xf32, #tpu.memory_space<vmem>>, %arg3: memref<1x1024xf32, #tpu.memory_space<vmem>>, %arg4: memref<1x1024xf32, #tpu.memory_space<vmem>>) attributes {dimension_semantics = [#tpu.dimension_semantics<arbitrary>], iteration_bounds = array<i64: 1>, scalar_prefetch = 0 : i64, scratch_operands = 0 : i64, tpu.core_type = #tpu.core_type<tc>, window_params = [{pipeline_mode = #tpu.pipeline_mode<synchronous>, transform_indices = @transform_0, window_bounds = array<i64: 1, 1024>}, {pipeline_mode = #tpu.pipeline_mode<synchronous>, transform_indices = @transform_1, window_bounds = array<i64: 1024, 1024>}, {pipeline_mode = #tpu.pipeline_mode<synchronous>, transform_indices = @transform_2, window_bounds = array<i64: 1, 1024>}, {pipeline_mode = #tpu.pipeline_mode<synchronous>, transform_indices = @transform_3, window_bounds = array<i64: 1, 1024>}]} {
    %c0 = arith.constant 0 : index
    %c0_0 = arith.constant 0 : index
    %0 = vector.load %arg1[%c0, %c0_0] : memref<1x1024xf32, #tpu.memory_space<vmem>>, vector<1x1024xf32>
    %c0_1 = arith.constant 0 : index
    %c0_2 = arith.constant 0 : index
    %1 = vector.load %arg2[%c0_1, %c0_2] : memref<1024x1024xf32, #tpu.memory_space<vmem>>, vector<1024x1024xf32>
    %cst = arith.constant dense<0.000000e+00> : vector<1x1024xf32>
    %2 = tpu.matmul %0, %1, %cst {dimension_numbers = #tpu.dot_dimension_numbers<[1], [0], [0], [1], [0, 0, 1, 1], [], []>} : vector<1x1024xf32>, vector<1024x1024xf32>, vector<1x1024xf32> -> vector<1x1024xf32>
    %c0_3 = arith.constant 0 : index
    %c0_4 = arith.constant 0 : index
    %3 = vector.load %arg3[%c0_3, %c0_4] : memref<1x1024xf32, #tpu.memory_space<vmem>>, vector<1x1024xf32>
    %4 = arith.addf %2, %3 : vector<1x1024xf32>
    %c0_5 = arith.constant 0 : index
    %c0_6 = arith.constant 0 : index
    %5 = vector.load %arg4[%c0_5, %c0_6] : memref<1x1024xf32, #tpu.memory_space<vmem>>, vector<1x1024xf32>
    tpu.vector_store %arg4[%c0_5, %c0_6], %4 {strides = array<i32>} : memref<1x1024xf32, #tpu.memory_space<vmem>>, vector<1x1024xf32>,
    return
  }
  func.func @transform_0(%arg0: i32) -> (i32, i32) {
    %c0_i32 = arith.constant 0 : i32
    %c0_i32_0 = arith.constant 0 : i32
    %c0_i32_1 = arith.constant 0 : i32
    return %c0_i32, %c0_i32_0 : i32, i32
  }
  func.func @transform_1(%arg0: i32) -> (i32, i32) {
    %c0_i32 = arith.constant 0 : i32
    %c0_i32_0 = arith.constant 0 : i32
    %c0_i32_1 = arith.constant 0 : i32
    return %c0_i32, %c0_i32_0 : i32, i32
  }
  func.func @transform_2(%arg0: i32) -> (i32, i32) {
    %c0_i32 = arith.constant 0 : i32
    %c0_i32_0 = arith.constant 0 : i32
    %c0_i32_1 = arith.constant 0 : i32
    return %c0_i32, %c0_i32_0 : i32, i32
  }
  func.func @transform_3(%arg0: i32) -> (i32, i32) {
    %c0_i32 = arith.constant 0 : i32
    %c0_i32_0 = arith.constant 0 : i32
    %c0_i32_1 = arith.constant 0 : i32
    return %c0_i32, %c0_i32_0 : i32, i32
  }
}

</mosaic_0001>

<llo_original>
// kernel: tpu_custom_call.1
$region0: #{tpu_custom_call.1}
  #allocation0 [shape = 'u32[]', space=smem, size = 0x4, offset = 0x4, fixed_abs, tag = 'smem constant byte address 0x4 - core index']
  #allocation1 [shape = 'u32[144,128]{1,0:T(1,128)}', space=vmem, size = 0x12000, scoped, tag = 'internal scratch']
  %s0 = inlined_call_operand.hbm [shape: f32[1,1024], index: 0, kind: input, shape index: {}]
  %s1 = inlined_call_operand.hbm [shape: f32[1024,1024], index: 1, kind: input, shape index: {}]
  %s2 = inlined_call_operand.hbm [shape: f32[1,1024], index: 2, kind: input, shape index: {}]
  %s3 = inlined_call_operand.hbm [shape: f32[1,1024], index: 3, kind: output, shape index: {}]
  %s4 = sld [smem:[#allocation0]]
  $region34: #{tpu_custom_call.1} parent=0
    _
  %s6 = ssub.s32 1, %s4
  %s7 = scalar_select 0, %s6, %s4
  $region1: #{tpu_custom_call.1} parent=0
    #allocation2 [shape = 'u8[4096]{0}', space=vmem, size = 0x1000, scoped, tag = 'input window, operand 0, single buffered']
    #allocation3 [shape = 's32[1]{0}', space=sflag, size = 0x4, scoped, tag = 'scoped memory for tpu_custom_call.1']
    #allocation4 [shape = 's32[1]{0}', space=sflag, size = 0x4, scoped, tag = 'scoped memory for tpu_custom_call.1']
    #allocation5 [shape = 'u8[4194304]{0}', space=vmem, size = 0x400000, scoped, tag = 'input window, operand 1, single buffered']
    #allocation6 [shape = 's32[1]{0}', space=sflag, size = 0x4, scoped, tag = 'scoped memory for tpu_custom_call.1']
    #allocation7 [shape = 'u8[4096]{0}', space=vmem, size = 0x1000, scoped, tag = 'input window, operand 2, single buffered']
    #allocation8 [shape = 'u8[4096]{0}', space=vmem, size = 0x1000, scoped, tag = 'output window, operand 0, single buffered']
    %8 = vsyncpa [#allocation3], 0
    %9 = vsyncpa [#allocation6], 0
    %10 = vsyncpa [#allocation4], 0
    // Predicated region
    $region2: #{tpu_custom_call.1} parent=1 // pred_check
      _
    $region3: #{tpu_custom_call.1} parent=1 // pred_check_branch
      %12 = sbr.rel (0) target = $region5
    $region4: #{tpu_custom_call.1} parent=1 // pred_region
      %s14 = ssub.s32 128, 128
      %15 = vsyncadd [#allocation3], %s14
      %s17 = sshll.u32 [#allocation2], 4
      %s18 = int_to_ptr.vmem [resolvable:$true] %s17
      %20 = dma.hbm_to_vmem [thread:$0]  %s0, 128, %s18, [#allocation3]
    $region5: #{tpu_custom_call.1} parent=1 // pred_fallthru
      _
    // Predicated region
    $region6: #{tpu_custom_call.1} parent=1 // pred_check
      _
    $region7: #{tpu_custom_call.1} parent=1 // pred_check_branch
      %22 = sbr.rel (0) target = $region9
    $region8: #{tpu_custom_call.1} parent=1 // pred_region
      %s24 = ssub.s32 131072, 131072
      %25 = vsyncadd [#allocation6], %s24
      %s26 = sshll.u32 [#allocation5], 4
      %s27 = int_to_ptr.vmem [resolvable:$true] %s26
      %32 = dma.hbm_to_vmem [thread:$0]  %s1, 131072, %s27, [#allocation6], 1024, 1024, 64
    $region9: #{tpu_custom_call.1} parent=1 // pred_fallthru
      _
    // Predicated region
    $region10: #{tpu_custom_call.1} parent=1 // pred_check
      _
    $region11: #{tpu_custom_call.1} parent=1 // pred_check_branch
      %34 = sbr.rel (0) target = $region13
    $region12: #{tpu_custom_call.1} parent=1 // pred_region
      %s36 = ssub.s32 128, 128
      %37 = vsyncadd [#allocation6], %s36
      %s39 = sshll.u32 [#allocation7], 4
      %s40 = int_to_ptr.vmem [resolvable:$true] %s39
      %42 = dma.hbm_to_vmem [thread:$0]  %s2, 128, %s40, [#allocation6]
    $region13: #{tpu_custom_call.1} parent=1 // pred_fallthru
      _
    // Predicated region
    $region14: #{tpu_custom_call.1} parent=1 // pred_check
      _
    $region15: #{tpu_custom_call.1} parent=1 // pred_check_branch
      %44 = sbr.rel (0) target = $region17
    $region16: #{tpu_custom_call.1} parent=1 // pred_region
      %45 = dma.done [#allocation3], 128
    $region17: #{tpu_custom_call.1} parent=1 // pred_fallthru
      _
    // Predicated region
    $region18: #{tpu_custom_call.1} parent=1 // pred_check
      _
    $region19: #{tpu_custom_call.1} parent=1 // pred_check_branch
      %47 = sbr.rel (0) target = $region21
    $region20: #{tpu_custom_call.1} parent=1 // pred_region
      %48 = dma.done [#allocation6], 131072
    $region21: #{tpu_custom_call.1} parent=1 // pred_fallthru
      _
    // Predicated region
    $region22: #{tpu_custom_call.1} parent=1 // pred_check
      _
    $region23: #{tpu_custom_call.1} parent=1 // pred_check_branch
      %50 = sbr.rel (0) target = $region25
    $region24: #{tpu_custom_call.1} parent=1 // pred_region
      %51 = dma.done [#allocation6], 128
    $region25: #{tpu_custom_call.1} parent=1 // pred_fallthru
      _
    %v52 = vld [vmem:[#allocation2] sm:$0xff]
    %v53 = vld [vmem:[#allocation5] sm:$0xff]
    %v54 = vld [vmem:[#allocation5 + $0x8] sm:$0xff]
    %v55 = vld [vmem:[#allocation5 + $0x10] sm:$0xff]
    %v56 = vld [vmem:[#allocation5 + $0x18] sm:$0xff]
    %v57 = vld [vmem:[#allocation5 + $0x20] sm:$0xff]
    %v58 = vld [vmem:[#allocation5 + $0x28] sm:$0xff]
    %v59 = vld [vmem:[#allocation5 + $0x30] sm:$0xff]
    %v60 = vld [vmem:[#allocation5 + $0x38] sm:$0xff]
    %v61 = vld [vmem:[#allocation5 + $0x40] sm:$0xff]
    %v62 = vld [vmem:[#allocation5 + $0x48] sm:$0xff]
    %v63 = vld [vmem:[#allocation5 + $0x50] sm:$0xff]
    %v64 = vld [vmem:[#allocation5 + $0x58] sm:$0xff]
    %v65 = vld [vmem:[#allocation5 + $0x60] sm:$0xff]
    %v66 = vld [vmem:[#allocation5 + $0x68] sm:$0xff]
    %v67 = vld [vmem:[#allocation5 + $0x70] sm:$0xff]
    %v68 = vld [vmem:[#allocation5 + $0x78] sm:$0xff]
    %v69 = vld [vmem:[#allocation5 + $0x80] sm:$0xff]
    %v70 = vld [vmem:[#allocation5 + $0x88] sm:$0xff]
    %v71 = vld [vmem:[#allocation5 + $0x90] sm:$0xff]
    %v72 = vld [vmem:[#allocation5 + $0x98] sm:$0xff]
    %v73 = vld [vmem:[#allocation5 + $0xa0] sm:$0xff]
    %v74 = vld [vmem:[#allocation5 + $0xa8] sm:$0xff]
    %v75 = vld [vmem:[#allocation5 + $0xb0] sm:$0xff]
    %v76 = vld [vmem:[#allocation5 + $0xb8] sm:$0xff]
    %v77 = vld [vmem:[#allocation5 + $0xc0] sm:$0xff]
    %v78 = vld [vmem:[#allocation5 + $0xc8] sm:$0xff]
    %v79 = vld [vmem:[#allocation5 + $0xd0] sm:$0xff]
    %v80 = vld [vmem:[#allocation5 + $0xd8] sm:$0xff]
    %v81 = vld [vmem:[#allocation5 + $0xe0] sm:$0xff]
    %v82 = vld [vmem:[#allocation5 + $0xe8] sm:$0xff]
    %v83 = vld [vmem:[#allocation5 + $0xf0] sm:$0xff]
    %v84 = vld [vmem:[#allocation5 + $0xf8] sm:$0xff]
    %v85 = vld [vmem:[#allocation5 + $0x100] sm:$0xff]
    %v86 = vld [vmem:[#allocation5 + $0x108] sm:$0xff]
    %v87 = vld [vmem:[#allocation5 + $0x110] sm:$0xff]
    %v88 = vld [vmem:[#allocation5 + $0x118] sm:$0xff]
    %v89 = vld [vmem:[#allocation5 + $0x120] sm:$0xff]
    %v90 = vld [vmem:[#allocation5 + $0x128] sm:$0xff]
    %v91 = vld [vmem:[#allocation5 + $0x130] sm:$0xff]
    %v92 = vld [vmem:[#allocation5 + $0x138] sm:$0xff]
    %v93 = vld [vmem:[#allocation5 + $0x140] sm:$0xff]
    %v94 = vld [vmem:[#allocation5 + $0x148] sm:$0xff]
    %v95 = vld [vmem:[#allocation5 + $0x150] sm:$0xff]
    %v96 = vld [vmem:[#allocation5 + $0x158] sm:$0xff]
    %v97 = vld [vmem:[#allocation5 + $0x160] sm:$0xff]
    %v98 = vld [vmem:[#allocation5 + $0x168] sm:$0xff]
    %v99 = vld [vmem:[#allocation5 + $0x170] sm:$0xff]
    %v100 = vld [vmem:[#allocation5 + $0x178] sm:$0xff]
    %v101 = vld [vmem:[#allocation5 + $0x180] sm:$0xff]
    %v102 = vld [vmem:[#allocation5 + $0x188] sm:$0xff]
    %v103 = vld [vmem:[#allocation5 + $0x190] sm:$0xff]
    %v104 = vld [vmem:[#allocation5 + $0x198] sm:$0xff]
    %v105 = vld [vmem:[#allocation5 + $0x1a0] sm:$0xff]
    %v106 = vld [vmem:[#allocation5 + $0x1a8] sm:$0xff]
    %v107 = vld [vmem:[#allocation5 + $0x1b0] sm:$0xff]
    %v108 = vld [vmem:[#allocation5 + $0x1b8] sm:$0xff]
    %v109 = vld [vmem:[#allocation5 + $0x1c0] sm:$0xff]
    %v110 = vld [vmem:[#allocation5 + $0x1c8] sm:$0xff]
    %v111 = vld [vmem:[#allocation5 + $0x1d0] sm:$0xff]
    %v112 = vld [vmem:[#allocation5 + $0x1d8] sm:$0xff]
    %v113 = vld [vmem:[#allocation5 + $0x1e0] sm:$0xff]
    %v114 = vld [vmem:[#allocation5 + $0x1e8] sm:$0xff]
    %v115 = vld [vmem:[#allocation5 + $0x1f0] sm:$0xff]
    %v116 = vld [vmem:[#allocation5 + $0x1f8] sm:$0xff]
    %v117 = vld [vmem:[#allocation5 + $0x200] sm:$0xff]
    %v118 = vld [vmem:[#allocation5 + $0x208] sm:$0xff]
    %v119 = vld [vmem:[#allocation5 + $0x210] sm:$0xff]
    %v120 = vld [vmem:[#allocation5 + $0x218] sm:$0xff]
    %v121 = vld [vmem:[#allocation5 + $0x220] sm:$0xff]
    %v122 = vld [vmem:[#allocation5 + $0x228] sm:$0xff]
    %v123 = vld [vmem:[#allocation5 + $0x230] sm:$0xff]
    %v124 = vld [vmem:[#allocation5 + $0x238] sm:$0xff]
    %v125 = vld [vmem:[#allocation5 + $0x240] sm:$0xff]
    %v126 = vld [vmem:[#allocation5 + $0x248] sm:$0xff]
    %v127 = vld [vmem:[#allocation5 + $0x250] sm:$0xff]
    %v128 = vld [vmem:[#allocation5 + $0x258] sm:$0xff]
    %v129 = vld [vmem:[#allocation5 + $0x260] sm:$0xff]
    %v130 = vld [vmem:[#allocation5 + $0x268] sm:$0xff]
    %v131 = vld [vmem:[#allocation5 + $0x270] sm:$0xff]
    %v132 = vld [vmem:[#allocation5 + $0x278] sm:$0xff]
    %v133 = vld [vmem:[#allocation5 + $0x280] sm:$0xff]
    %v134 = vld [vmem:[#allocation5 + $0x288] sm:$0xff]
    %v135 = vld [vmem:[#allocation5 + $0x290] sm:$0xff]
    %v136 = vld [vmem:[#allocation5 + $0x298] sm:$0xff]
    %v137 = vld [vmem:[#allocation5 + $0x2a0] sm:$0xff]
    %v138 = vld [vmem:[#allocation5 + $0x2a8] sm:$0xff]
    %v139 = vld [vmem:[#allocation5 + $0x2b0] sm:$0xff]
    %v140 = vld [vmem:[#allocation5 + $0x2b8] sm:$0xff]
    %v141 = vld [vmem:[#allocation5 + $0x2c0] sm:$0xff]
    %v142 = vld [vmem:[#allocation5 + $0x2c8] sm:$0xff]
    %v143 = vld [vmem:[#allocation5 + $0x2d0] sm:$0xff]
    %v144 = vld [vmem:[#allocation5 + $0x2d8] sm:$0xff]
    %v145 = vld [vmem:[#allocation5 + $0x2e0] sm:$0xff]
    %v146 = vld [vmem:[#allocation5 + $0x2e8] sm:$0xff]
    %v147 = vld [vmem:[#allocation5 + $0x2f0] sm:$0xff]
    %v148 = vld [vmem:[#allocation5 + $0x2f8] sm:$0xff]
    %v149 = vld [vmem:[#allocation5 + $0x300] sm:$0xff]
    %v150 = vld [vmem:[#allocation5 + $0x308] sm:$0xff]
    %v151 = vld [vmem:[#allocation5 + $0x310] sm:$0xff]
    %v152 = vld [vmem:[#allocation5 + $0x318] sm:$0xff]
    %v153 = vld [vmem:[#allocation5 + $0x320] sm:$0xff]
    %v154 = vld [vmem:[#allocation5 + $0x328] sm:$0xff]
    %v155 = vld [vmem:[#allocation5 + $0x330] sm:$0xff]
    %v156 = vld [vmem:[#allocation5 + $0x338] sm:$0xff]
    %v157 = vld [vmem:[#allocation5 + $0x340] sm:$0xff]
    %v158 = vld [vmem:[#allocation5 + $0x348] sm:$0xff]
    %v159 = vld [vmem:[#allocation5 + $0x350] sm:$0xff]
    %v160 = vld [vmem:[#allocation5 + $0x358] sm:$0xff]
    %v161 = vld [vmem:[#allocation5 + $0x360] sm:$0xff]
    %v162 = vld [vmem:[#allocation5 + $0x368] sm:$0xff]
    %v163 = vld [vmem:[#allocation5 + $0x370] sm:$0xff]
    %v164 = vld [vmem:[#allocation5 + $0x378] sm:$0xff]
    %v165 = vld [vmem:[#allocation5 + $0x380] sm:$0xff]
    %v166 = vld [vmem:[#allocation5 + $0x388] sm:$0xff]
    %v167 = vld [vmem:[#allocation5 + $0x390] sm:$0xff]
    %v168 = vld [vmem:[#allocation5 + $0x398] sm:$0xff]
    %v169 = vld [vmem:[#allocation5 + $0x3a0] sm:$0xff]
    %v170 = vld [vmem:[#allocation5 + $0x3a8] sm:$0xff]
    %v171 = vld [vmem:[#allocation5 + $0x3b0] sm:$0xff]
    %v172 = vld [vmem:[#allocation5 + $0x3b8] sm:$0xff]
    %v173 = vld [vmem:[#allocation5 + $0x3c0] sm:$0xff]
    %v174 = vld [vmem:[#allocation5 + $0x3c8] sm:$0xff]
    %v175 = vld [vmem:[#allocation5 + $0x3d0] sm:$0xff]
    %v176 = vld [vmem:[#allocation5 + $0x3d8] sm:$0xff]
    %v177 = vld [vmem:[#allocation5 + $0x3e0] sm:$0xff]
    %v178 = vld [vmem:[#allocation5 + $0x3e8] sm:$0xff]
    %v179 = vld [vmem:[#allocation5 + $0x3f0] sm:$0xff]
    %v180 = vld [vmem:[#allocation5 + $0x3f8] sm:$0xff]
    %v181 = vld [vmem:[#allocation5 + $0x400] sm:$0xff]
    %v182 = vld [vmem:[#allocation5 + $0x408] sm:$0xff]
    %v183 = vld [vmem:[#allocation5 + $0x410] sm:$0xff]
    %v184 = vld [vmem:[#allocation5 + $0x418] sm:$0xff]
    %v185 = vld [vmem:[#allocation5 + $0x420] sm:$0xff]
    %v186 = vld [vmem:[#allocation5 + $0x428] sm:$0xff]
    %v187 = vld [vmem:[#allocation5 + $0x430] sm:$0xff]
    %v188 = vld [vmem:[#allocation5 + $0x438] sm:$0xff]
    %v189 = vld [vmem:[#allocation5 + $0x440] sm:$0xff]
    %v190 = vld [vmem:[#allocation5 + $0x448] sm:$0xff]
    %v191 = vld [vmem:[#allocation5 + $0x450] sm:$0xff]
    %v192 = vld [vmem:[#allocation5 + $0x458] sm:$0xff]
    %v193 = vld [vmem:[#allocation5 + $0x460] sm:$0xff]
    %v194 = vld [vmem:[#allocation5 + $0x468] sm:$0xff]
    %v195 = vld [vmem:[#allocation5 + $0x470] sm:$0xff]
    %v196 = vld [vmem:[#allocation5 + $0x478] sm:$0xff]
    %v197 = vld [vmem:[#allocation5 + $0x480] sm:$0xff]
    %v198 = vld [vmem:[#allocation5 + $0x488] sm:$0xff]
    %v199 = vld [vmem:[#allocation5 + $0x490] sm:$0xff]
    %v200 = vld [vmem:[#allocation5 + $0x498] sm:$0xff]
    %v201 = vld [vmem:[#allocation5 + $0x4a0] sm:$0xff]
    %v202 = vld [vmem:[#allocation5 + $0x4a8] sm:$0xff]
    %v203 = vld [vmem:[#allocation5 + $0x4b0] sm:$0xff]
    %v204 = vld [vmem:[#allocation5 + $0x4b8] sm:$0xff]
    %v205 = vld [vmem:[#allocation5 + $0x4c0] sm:$0xff]
    %v206 = vld [vmem:[#allocation5 + $0x4c8] sm:$0xff]
    %v207 = vld [vmem:[#allocation5 + $0x4d0] sm:$0xff]
    %v208 = vld [vmem:[#allocation5 + $0x4d8] sm:$0xff]
    %v209 = vld [vmem:[#allocation5 + $0x4e0] sm:$0xff]
    %v210 = vld [vmem:[#allocation5 + $0x4e8] sm:$0xff]
    %v211 = vld [vmem:[#allocation5 + $0x4f0] sm:$0xff]
    %v212 = vld [vmem:[#allocation5 + $0x4f8] sm:$0xff]
    %v213 = vld [vmem:[#allocation5 + $0x500] sm:$0xff]
    %v214 = vld [vmem:[#allocation5 + $0x508] sm:$0xff]
    %v215 = vld [vmem:[#allocation5 + $0x510] sm:$0xff]
    %v216 = vld [vmem:[#allocation5 + $0x518] sm:$0xff]
    %v217 = vld [vmem:[#allocation5 + $0x520] sm:$0xff]
    %v218 = vld [vmem:[#allocation5 + $0x528] sm:$0xff]
    %v219 = vld [vmem:[#allocation5 + $0x530] sm:$0xff]
    %v220 = vld [vmem:[#allocation5 + $0x538] sm:$0xff]
    %v221 = vld [vmem:[#allocation5 + $0x540] sm:$0xff]
    %v222 = vld [vmem:[#allocation5 + $0x548] sm:$0xff]
    %v223 = vld [vmem:[#allocation5 + $0x550] sm:$0xff]
    %v224 = vld [vmem:[#allocation5 + $0x558] sm:$0xff]
    %v225 = vld [vmem:[#allocation5 + $0x560] sm:$0xff]
    %v226 = vld [vmem:[#allocation5 + $0x568] sm:$0xff]
    %v227 = vld [vmem:[#allocation5 + $0x570] sm:$0xff]
    %v228 = vld [vmem:[#allocation5 + $0x578] sm:$0xff]
    %v229 = vld [vmem:[#allocation5 + $0x580] sm:$0xff]
    %v230 = vld [vmem:[#allocation5 + $0x588] sm:$0xff]
    %v231 = vld [vmem:[#allocation5 + $0x590] sm:$0xff]
    %v232 = vld [vmem:[#allocation5 + $0x598] sm:$0xff]
    %v233 = vld [vmem:[#allocation5 + $0x5a0] sm:$0xff]
    %v234 = vld [vmem:[#allocation5 + $0x5a8] sm:$0xff]
    %v235 = vld [vmem:[#allocation5 + $0x5b0] sm:$0xff]
    %v236 = vld [vmem:[#allocation5 + $0x5b8] sm:$0xff]
    %v237 = vld [vmem:[#allocation5 + $0x5c0] sm:$0xff]
    %v238 = vld [vmem:[#allocation5 + $0x5c8] sm:$0xff]
    %v239 = vld [vmem:[#allocation5 + $0x5d0] sm:$0xff]
    %v240 = vld [vmem:[#allocation5 + $0x5d8] sm:$0xff]
    %v241 = vld [vmem:[#allocation5 + $0x5e0] sm:$0xff]
    %v242 = vld [vmem:[#allocation5 + $0x5e8] sm:$0xff]
    %v243 = vld [vmem:[#allocation5 + $0x5f0] sm:$0xff]
    %v244 = vld [vmem:[#allocation5 + $0x5f8] sm:$0xff]
    %v245 = vld [vmem:[#allocation5 + $0x600] sm:$0xff]
    %v246 = vld [vmem:[#allocation5 + $0x608] sm:$0xff]
    %v247 = vld [vmem:[#allocation5 + $0x610] sm:$0xff]
    %v248 = vld [vmem:[#allocation5 + $0x618] sm:$0xff]
    %v249 = vld [vmem:[#allocation5 + $0x620] sm:$0xff]
    %v250 = vld [vmem:[#allocation5 + $0x628] sm:$0xff]
    %v251 = vld [vmem:[#allocation5 + $0x630] sm:$0xff]
    %v252 = vld [vmem:[#allocation5 + $0x638] sm:$0xff]
    %v253 = vld [vmem:[#allocation5 + $0x640] sm:$0xff]
    %v254 = vld [vmem:[#allocation5 + $0x648] sm:$0xff]
    %v255 = vld [vmem:[#allocation5 + $0x650] sm:$0xff]
    %v256 = vld [vmem:[#allocation5 + $0x658] sm:$0xff]
    %v257 = vld [vmem:[#allocation5 + $0x660] sm:$0xff]
    %v258 = vld [vmem:[#allocation5 + $0x668] sm:$0xff]
    %v259 = vld [vmem:[#allocation5 + $0x670] sm:$0xff]
    %v260 = vld [vmem:[#allocation5 + $0x678] sm:$0xff]
    %v261 = vld [vmem:[#allocation5 + $0x680] sm:$0xff]
    %v262 = vld [vmem:[#allocation5 + $0x688] sm:$0xff]
    %v263 = vld [vmem:[#allocation5 + $0x690] sm:$0xff]
    %v264 = vld [vmem:[#allocation5 + $0x698] sm:$0xff]
    %v265 = vld [vmem:[#allocation5 + $0x6a0] sm:$0xff]
    %v266 = vld [vmem:[#allocation5 + $0x6a8] sm:$0xff]
    %v267 = vld [vmem:[#allocation5 + $0x6b0] sm:$0xff]
    %v268 = vld [vmem:[#allocation5 + $0x6b8] sm:$0xff]
    %v269 = vld [vmem:[#allocation5 + $0x6c0] sm:$0xff]
    %v270 = vld [vmem:[#allocation5 + $0x6c8] sm:$0xff]
    %v271 = vld [vmem:[#allocation5 + $0x6d0] sm:$0xff]
    %v272 = vld [vmem:[#allocation5 + $0x6d8] sm:$0xff]
    %v273 = vld [vmem:[#allocation5 + $0x6e0] sm:$0xff]
    %v274 = vld [vmem:[#allocation5 + $0x6e8] sm:$0xff]
    %v275 = vld [vmem:[#allocation5 + $0x6f0] sm:$0xff]
    %v276 = vld [vmem:[#allocation5 + $0x6f8] sm:$0xff]
    %v277 = vld [vmem:[#allocation5 + $0x700] sm:$0xff]
    %v278 = vld [vmem:[#allocation5 + $0x708] sm:$0xff]
    %v279 = vld [vmem:[#allocation5 + $0x710] sm:$0xff]
    %v280 = vld [vmem:[#allocation5 + $0x718] sm:$0xff]
    %v281 = vld [vmem:[#allocation5 + $0x720] sm:$0xff]
    %v282 = vld [vmem:[#allocation5 + $0x728] sm:$0xff]
    %v283 = vld [vmem:[#allocation5 + $0x730] sm:$0xff]
    %v284 = vld [vmem:[#allocation5 + $0x738] sm:$0xff]
    %v285 = vld [vmem:[#allocation5 + $0x740] sm:$0xff]
    %v286 = vld [vmem:[#allocation5 + $0x748] sm:$0xff]
    %v287 = vld [vmem:[#allocation5 + $0x750] sm:$0xff]
    %v288 = vld [vmem:[#allocation5 + $0x758] sm:$0xff]
    %v289 = vld [vmem:[#allocation5 + $0x760] sm:$0xff]
    %v290 = vld [vmem:[#allocation5 + $0x768] sm:$0xff]
    %v291 = vld [vmem:[#allocation5 + $0x770] sm:$0xff]
    %v292 = vld [vmem:[#allocation5 + $0x778] sm:$0xff]
    %v293 = vld [vmem:[#allocation5 + $0x780] sm:$0xff]
    %v294 = vld [vmem:[#allocation5 + $0x788] sm:$0xff]
    %v295 = vld [vmem:[#allocation5 + $0x790] sm:$0xff]
    %v296 = vld [vmem:[#allocation5 + $0x798] sm:$0xff]
    %v297 = vld [vmem:[#allocation5 + $0x7a0] sm:$0xff]
    %v298 = vld [vmem:[#allocation5 + $0x7a8] sm:$0xff]
    %v299 = vld [vmem:[#allocation5 + $0x7b0] sm:$0xff]
    %v300 = vld [vmem:[#allocation5 + $0x7b8] sm:$0xff]
    %v301 = vld [vmem:[#allocation5 + $0x7c0] sm:$0xff]
    %v302 = vld [vmem:[#allocation5 + $0x7c8] sm:$0xff]
    %v303 = vld [vmem:[#allocation5 + $0x7d0] sm:$0xff]
    %v304 = vld [vmem:[#allocation5 + $0x7d8] sm:$0xff]
    %v305 = vld [vmem:[#allocation5 + $0x7e0] sm:$0xff]
    %v306 = vld [vmem:[#allocation5 + $0x7e8] sm:$0xff]
    %v307 = vld [vmem:[#allocation5 + $0x7f0] sm:$0xff]
    %v308 = vld [vmem:[#allocation5 + $0x7f8] sm:$0xff]
    %v309 = vld [vmem:[#allocation5 + $0x800] sm:$0xff]
    %v310 = vld [vmem:[#allocation5 + $0x808] sm:$0xff]
    %v311 = vld [vmem:[#allocation5 + $0x810] sm:$0xff]
    %v312 = vld [vmem:[#allocation5 + $0x818] sm:$0xff]
    %v313 = vld [vmem:[#allocation5 + $0x820] sm:$0xff]
    %v314 = vld [vmem:[#allocation5 + $0x828] sm:$0xff]
    %v315 = vld [vmem:[#allocation5 + $0x830] sm:$0xff]
    %v316 = vld [vmem:[#allocation5 + $0x838] sm:$0xff]
    %v317 = vld [vmem:[#allocation5 + $0x840] sm:$0xff]
    %v318 = vld [vmem:[#allocation5 + $0x848] sm:$0xff]
    %v319 = vld [vmem:[#allocation5 + $0x850] sm:$0xff]
    %v320 = vld [vmem:[#allocation5 + $0x858] sm:$0xff]
    %v321 = vld [vmem:[#allocation5 + $0x860] sm:$0xff]
    %v322 = vld [vmem:[#allocation5 + $0x868] sm:$0xff]
    %v323 = vld [vmem:[#allocation5 + $0x870] sm:$0xff]
    %v324 = vld [vmem:[#allocation5 + $0x878] sm:$0xff]
    %v325 = vld [vmem:[#allocation5 + $0x880] sm:$0xff]
    %v326 = vld [vmem:[#allocation5 + $0x888] sm:$0xff]
    %v327 = vld [vmem:[#allocation5 + $0x890] sm:$0xff]
    %v328 = vld [vmem:[#allocation5 + $0x898] sm:$0xff]
    %v329 = vld [vmem:[#allocation5 + $0x8a0] sm:$0xff]
    %v330 = vld [vmem:[#allocation5 + $0x8a8] sm:$0xff]
    %v331 = vld [vmem:[#allocation5 + $0x8b0] sm:$0xff]
    %v332 = vld [vmem:[#allocation5 + $0x8b8] sm:$0xff]
    %v333 = vld [vmem:[#allocation5 + $0x8c0] sm:$0xff]
    %v334 = vld [vmem:[#allocation5 + $0x8c8] sm:$0xff]
    %v335 = vld [vmem:[#allocation5 + $0x8d0] sm:$0xff]
    %v336 = vld [vmem:[#allocation5 + $0x8d8] sm:$0xff]
    %v337 = vld [vmem:[#allocation5 + $0x8e0] sm:$0xff]
    %v338 = vld [vmem:[#allocation5 + $0x8e8] sm:$0xff]
    %v339 = vld [vmem:[#allocation5 + $0x8f0] sm:$0xff]
    %v340 = vld [vmem:[#allocation5 + $0x8f8] sm:$0xff]
    %v341 = vld [vmem:[#allocation5 + $0x900] sm:$0xff]
    %v342 = vld [vmem:[#allocation5 + $0x908] sm:$0xff]
    %v343 = vld [vmem:[#allocation5 + $0x910] sm:$0xff]
    %v344 = vld [vmem:[#allocation5 + $0x918] sm:$0xff]
    %v345 = vld [vmem:[#allocation5 + $0x920] sm:$0xff]
    %v346 = vld [vmem:[#allocation5 + $0x928] sm:$0xff]
    %v347 = vld [vmem:[#allocation5 + $0x930] sm:$0xff]
    %v348 = vld [vmem:[#allocation5 + $0x938] sm:$0xff]
    %v349 = vld [vmem:[#allocation5 + $0x940] sm:$0xff]
    %v350 = vld [vmem:[#allocation5 + $0x948] sm:$0xff]
    %v351 = vld [vmem:[#allocation5 + $0x950] sm:$0xff]
    %v352 = vld [vmem:[#allocation5 + $0x958] sm:$0xff]
    %v353 = vld [vmem:[#allocation5 + $0x960] sm:$0xff]
    %v354 = vld [vmem:[#allocation5 + $0x968] sm:$0xff]
    %v355 = vld [vmem:[#allocation5 + $0x970] sm:$0xff]
    %v356 = vld [vmem:[#allocation5 + $0x978] sm:$0xff]
    %v357 = vld [vmem:[#allocation5 + $0x980] sm:$0xff]
    %v358 = vld [vmem:[#allocation5 + $0x988] sm:$0xff]
    %v359 = vld [vmem:[#allocation5 + $0x990] sm:$0xff]
    %v360 = vld [vmem:[#allocation5 + $0x998] sm:$0xff]
    %v361 = vld [vmem:[#allocation5 + $0x9a0] sm:$0xff]
    %v362 = vld [vmem:[#allocation5 + $0x9a8] sm:$0xff]
    %v363 = vld [vmem:[#allocation5 + $0x9b0] sm:$0xff]
    %v364 = vld [vmem:[#allocation5 + $0x9b8] sm:$0xff]
    %v365 = vld [vmem:[#allocation5 + $0x9c0] sm:$0xff]
    %v366 = vld [vmem:[#allocation5 + $0x9c8] sm:$0xff]
    %v367 = vld [vmem:[#allocation5 + $0x9d0] sm:$0xff]
    %v368 = vld [vmem:[#allocation5 + $0x9d8] sm:$0xff]
    %v369 = vld [vmem:[#allocation5 + $0x9e0] sm:$0xff]
    %v370 = vld [vmem:[#allocation5 + $0x9e8] sm:$0xff]
    %v371 = vld [vmem:[#allocation5 + $0x9f0] sm:$0xff]
    %v372 = vld [vmem:[#allocation5 + $0x9f8] sm:$0xff]
    %v373 = vld [vmem:[#allocation5 + $0xa00] sm:$0xff]
    %v374 = vld [vmem:[#allocation5 + $0xa08] sm:$0xff]
    %v375 = vld [vmem:[#allocation5 + $0xa10] sm:$0xff]
    %v376 = vld [vmem:[#allocation5 + $0xa18] sm:$0xff]
    %v377 = vld [vmem:[#allocation5 + $0xa20] sm:$0xff]
    %v378 = vld [vmem:[#allocation5 + $0xa28] sm:$0xff]
    %v379 = vld [vmem:[#allocation5 + $0xa30] sm:$0xff]
    %v380 = vld [vmem:[#allocation5 + $0xa38] sm:$0xff]
    %v381 = vld [vmem:[#allocation5 + $0xa40] sm:$0xff]
    %v382 = vld [vmem:[#allocation5 + $0xa48] sm:$0xff]
    %v383 = vld [vmem:[#allocation5 + $0xa50] sm:$0xff]
    %v384 = vld [vmem:[#allocation5 + $0xa58] sm:$0xff]
    %v385 = vld [vmem:[#allocation5 + $0xa60] sm:$0xff]
    %v386 = vld [vmem:[#allocation5 + $0xa68] sm:$0xff]
    %v387 = vld [vmem:[#allocation5 + $0xa70] sm:$0xff]
    %v388 = vld [vmem:[#allocation5 + $0xa78] sm:$0xff]
    %v389 = vld [vmem:[#allocation5 + $0xa80] sm:$0xff]
    %v390 = vld [vmem:[#allocation5 + $0xa88] sm:$0xff]
    %v391 = vld [vmem:[#allocation5 + $0xa90] sm:$0xff]
    %v392 = vld [vmem:[#allocation5 + $0xa98] sm:$0xff]
    %v393 = vld [vmem:[#allocation5 + $0xaa0] sm:$0xff]
    %v394 = vld [vmem:[#allocation5 + $0xaa8] sm:$0xff]
    %v395 = vld [vmem:[#allocation5 + $0xab0] sm:$0xff]
    %v396 = vld [vmem:[#allocation5 + $0xab8] sm:$0xff]
    %v397 = vld [vmem:[#allocation5 + $0xac0] sm:$0xff]
    %v398 = vld [vmem:[#allocation5 + $0xac8] sm:$0xff]
    %v399 = vld [vmem:[#allocation5 + $0xad0] sm:$0xff]
    %v400 = vld [vmem:[#allocation5 + $0xad8] sm:$0xff]
    %v401 = vld [vmem:[#allocation5 + $0xae0] sm:$0xff]
    %v402 = vld [vmem:[#allocation5 + $0xae8] sm:$0xff]
    %v403 = vld [vmem:[#allocation5 + $0xaf0] sm:$0xff]
    %v404 = vld [vmem:[#allocation5 + $0xaf8] sm:$0xff]
    %v405 = vld [vmem:[#allocation5 + $0xb00] sm:$0xff]
    %v406 = vld [vmem:[#allocation5 + $0xb08] sm:$0xff]
    %v407 = vld [vmem:[#allocation5 + $0xb10] sm:$0xff]
    %v408 = vld [vmem:[#allocation5 + $0xb18] sm:$0xff]
    %v409 = vld [vmem:[#allocation5 + $0xb20] sm:$0xff]
    %v410 = vld [vmem:[#allocation5 + $0xb28] sm:$0xff]
    %v411 = vld [vmem:[#allocation5 + $0xb30] sm:$0xff]
    %v412 = vld [vmem:[#allocation5 + $0xb38] sm:$0xff]
    %v413 = vld [vmem:[#allocation5 + $0xb40] sm:$0xff]
    %v414 = vld [vmem:[#allocation5 + $0xb48] sm:$0xff]
    %v415 = vld [vmem:[#allocation5 + $0xb50] sm:$0xff]
    %v416 = vld [vmem:[#allocation5 + $0xb58] sm:$0xff]
    %v417 = vld [vmem:[#allocation5 + $0xb60] sm:$0xff]
    %v418 = vld [vmem:[#allocation5 + $0xb68] sm:$0xff]
    %v419 = vld [vmem:[#allocation5 + $0xb70] sm:$0xff]
    %v420 = vld [vmem:[#allocation5 + $0xb78] sm:$0xff]
    %v421 = vld [vmem:[#allocation5 + $0xb80] sm:$0xff]
    %v422 = vld [vmem:[#allocation5 + $0xb88] sm:$0xff]
    %v423 = vld [vmem:[#allocation5 + $0xb90] sm:$0xff]
    %v424 = vld [vmem:[#allocation5 + $0xb98] sm:$0xff]
    %v425 = vld [vmem:[#allocation5 + $0xba0] sm:$0xff]
    %v426 = vld [vmem:[#allocation5 + $0xba8] sm:$0xff]
    %v427 = vld [vmem:[#allocation5 + $0xbb0] sm:$0xff]
    %v428 = vld [vmem:[#allocation5 + $0xbb8] sm:$0xff]
    %v429 = vld [vmem:[#allocation5 + $0xbc0] sm:$0xff]
    %v430 = vld [vmem:[#allocation5 + $0xbc8] sm:$0xff]
    %v431 = vld [vmem:[#allocation5 + $0xbd0] sm:$0xff]
    %v432 = vld [vmem:[#allocation5 + $0xbd8] sm:$0xff]
    %v433 = vld [vmem:[#allocation5 + $0xbe0] sm:$0xff]
    %v434 = vld [vmem:[#allocation5 + $0xbe8] sm:$0xff]
    %v435 = vld [vmem:[#allocation5 + $0xbf0] sm:$0xff]
    %v436 = vld [vmem:[#allocation5 + $0xbf8] sm:$0xff]
    %v437 = vld [vmem:[#allocation5 + $0xc00] sm:$0xff]
    %v438 = vld [vmem:[#allocation5 + $0xc08] sm:$0xff]
    %v439 = vld [vmem:[#allocation5 + $0xc10] sm:$0xff]
    %v440 = vld [vmem:[#allocation5 + $0xc18] sm:$0xff]
    %v441 = vld [vmem:[#allocation5 + $0xc20] sm:$0xff]
    %v442 = vld [vmem:[#allocation5 + $0xc28] sm:$0xff]
    %v443 = vld [vmem:[#allocation5 + $0xc30] sm:$0xff]
    %v444 = vld [vmem:[#allocation5 + $0xc38] sm:$0xff]
    %v445 = vld [vmem:[#allocation5 + $0xc40] sm:$0xff]
    %v446 = vld [vmem:[#allocation5 + $0xc48] sm:$0xff]
    %v447 = vld [vmem:[#allocation5 + $0xc50] sm:$0xff]
    %v448 = vld [vmem:[#allocation5 + $0xc58] sm:$0xff]
    %v449 = vld [vmem:[#allocation5 + $0xc60] sm:$0xff]
    %v450 = vld [vmem:[#allocation5 + $0xc68] sm:$0xff]
    %v451 = vld [vmem:[#allocation5 + $0xc70] sm:$0xff]
    %v452 = vld [vmem:[#allocation5 + $0xc78] sm:$0xff]
    %v453 = vld [vmem:[#allocation5 + $0xc80] sm:$0xff]
    %v454 = vld [vmem:[#allocation5 + $0xc88] sm:$0xff]
    %v455 = vld [vmem:[#allocation5 + $0xc90] sm:$0xff]
    %v456 = vld [vmem:[#allocation5 + $0xc98] sm:$0xff]
    %v457 = vld [vmem:[#allocation5 + $0xca0] sm:$0xff]
    %v458 = vld [vmem:[#allocation5 + $0xca8] sm:$0xff]
    %v459 = vld [vmem:[#allocation5 + $0xcb0] sm:$0xff]
    %v460 = vld [vmem:[#allocation5 + $0xcb8] sm:$0xff]
    %v461 = vld [vmem:[#allocation5 + $0xcc0] sm:$0xff]
    %v462 = vld [vmem:[#allocation5 + $0xcc8] sm:$0xff]
    %v463 = vld [vmem:[#allocation5 + $0xcd0] sm:$0xff]
    %v464 = vld [vmem:[#allocation5 + $0xcd8] sm:$0xff]
    %v465 = vld [vmem:[#allocation5 + $0xce0] sm:$0xff]
    %v466 = vld [vmem:[#allocation5 + $0xce8] sm:$0xff]
    %v467 = vld [vmem:[#allocation5 + $0xcf0] sm:$0xff]
    %v468 = vld [vmem:[#allocation5 + $0xcf8] sm:$0xff]
    %v469 = vld [vmem:[#allocation5 + $0xd00] sm:$0xff]
    %v470 = vld [vmem:[#allocation5 + $0xd08] sm:$0xff]
    %v471 = vld [vmem:[#allocation5 + $0xd10] sm:$0xff]
    %v472 = vld [vmem:[#allocation5 + $0xd18] sm:$0xff]
    %v473 = vld [vmem:[#allocation5 + $0xd20] sm:$0xff]
    %v474 = vld [vmem:[#allocation5 + $0xd28] sm:$0xff]
    %v475 = vld [vmem:[#allocation5 + $0xd30] sm:$0xff]
    %v476 = vld [vmem:[#allocation5 + $0xd38] sm:$0xff]
    %v477 = vld [vmem:[#allocation5 + $0xd40] sm:$0xff]
    %v478 = vld [vmem:[#allocation5 + $0xd48] sm:$0xff]
    %v479 = vld [vmem:[#allocation5 + $0xd50] sm:$0xff]
    %v480 = vld [vmem:[#allocation5 + $0xd58] sm:$0xff]
    %v481 = vld [vmem:[#allocation5 + $0xd60] sm:$0xff]
    %v482 = vld [vmem:[#allocation5 + $0xd68] sm:$0xff]
    %v483 = vld [vmem:[#allocation5 + $0xd70] sm:$0xff]
    %v484 = vld [vmem:[#allocation5 + $0xd78] sm:$0xff]
    %v485 = vld [vmem:[#allocation5 + $0xd80] sm:$0xff]
    %v486 = vld [vmem:[#allocation5 + $0xd88] sm:$0xff]
    %v487 = vld [vmem:[#allocation5 + $0xd90] sm:$0xff]
    %v488 = vld [vmem:[#allocation5 + $0xd98] sm:$0xff]
    %v489 = vld [vmem:[#allocation5 + $0xda0] sm:$0xff]
    %v490 = vld [vmem:[#allocation5 + $0xda8] sm:$0xff]
    %v491 = vld [vmem:[#allocation5 + $0xdb0] sm:$0xff]
    %v492 = vld [vmem:[#allocation5 + $0xdb8] sm:$0xff]
    %v493 = vld [vmem:[#allocation5 + $0xdc0] sm:$0xff]
    %v494 = vld [vmem:[#allocation5 + $0xdc8] sm:$0xff]
    %v495 = vld [vmem:[#allocation5 + $0xdd0] sm:$0xff]
    %v496 = vld [vmem:[#allocation5 + $0xdd8] sm:$0xff]
    %v497 = vld [vmem:[#allocation5 + $0xde0] sm:$0xff]
    %v498 = vld [vmem:[#allocation5 + $0xde8] sm:$0xff]
    %v499 = vld [vmem:[#allocation5 + $0xdf0] sm:$0xff]
    %v500 = vld [vmem:[#allocation5 + $0xdf8] sm:$0xff]
    %v501 = vld [vmem:[#allocation5 + $0xe00] sm:$0xff]
    %v502 = vld [vmem:[#allocation5 + $0xe08] sm:$0xff]
    %v503 = vld [vmem:[#allocation5 + $0xe10] sm:$0xff]
    %v504 = vld [vmem:[#allocation5 + $0xe18] sm:$0xff]
    %v505 = vld [vmem:[#allocation5 + $0xe20] sm:$0xff]
    %v506 = vld [vmem:[#allocation5 + $0xe28] sm:$0xff]
    %v507 = vld [vmem:[#allocation5 + $0xe30] sm:$0xff]
    %v508 = vld [vmem:[#allocation5 + $0xe38] sm:$0xff]
    %v509 = vld [vmem:[#allocation5 + $0xe40] sm:$0xff]
    %v510 = vld [vmem:[#allocation5 + $0xe48] sm:$0xff]
    %v511 = vld [vmem:[#allocation5 + $0xe50] sm:$0xff]
    %v512 = vld [vmem:[#allocation5 + $0xe58] sm:$0xff]
    %v513 = vld [vmem:[#allocation5 + $0xe60] sm:$0xff]
    %v514 = vld [vmem:[#allocation5 + $0xe68] sm:$0xff]
    %v515 = vld [vmem:[#allocation5 + $0xe70] sm:$0xff]
    %v516 = vld [vmem:[#allocation5 + $0xe78] sm:$0xff]
    %v517 = vld [vmem:[#allocation5 + $0xe80] sm:$0xff]
    %v518 = vld [vmem:[#allocation5 + $0xe88] sm:$0xff]
    %v519 = vld [vmem:[#allocation5 + $0xe90] sm:$0xff]
    %v520 = vld [vmem:[#allocation5 + $0xe98] sm:$0xff]
    %v521 = vld [vmem:[#allocation5 + $0xea0] sm:$0xff]
    %v522 = vld [vmem:[#allocation5 + $0xea8] sm:$0xff]
    %v523 = vld [vmem:[#allocation5 + $0xeb0] sm:$0xff]
    %v524 = vld [vmem:[#allocation5 + $0xeb8] sm:$0xff]
    %v525 = vld [vmem:[#allocation5 + $0xec0] sm:$0xff]
    %v526 = vld [vmem:[#allocation5 + $0xec8] sm:$0xff]
    %v527 = vld [vmem:[#allocation5 + $0xed0] sm:$0xff]
    %v528 = vld [vmem:[#allocation5 + $0xed8] sm:$0xff]
    %v529 = vld [vmem:[#allocation5 + $0xee0] sm:$0xff]
    %v530 = vld [vmem:[#allocation5 + $0xee8] sm:$0xff]
    %v531 = vld [vmem:[#allocation5 + $0xef0] sm:$0xff]
    %v532 = vld [vmem:[#allocation5 + $0xef8] sm:$0xff]
    %v533 = vld [vmem:[#allocation5 + $0xf00] sm:$0xff]
    %v534 = vld [vmem:[#allocation5 + $0xf08] sm:$0xff]
    %v535 = vld [vmem:[#allocation5 + $0xf10] sm:$0xff]
    %v536 = vld [vmem:[#allocation5 + $0xf18] sm:$0xff]
    %v537 = vld [vmem:[#allocation5 + $0xf20] sm:$0xff]
    %v538 = vld [vmem:[#allocation5 + $0xf28] sm:$0xff]
    %v539 = vld [vmem:[#allocation5 + $0xf30] sm:$0xff]
    %v540 = vld [vmem:[#allocation5 + $0xf38] sm:$0xff]
    %v541 = vld [vmem:[#allocation5 + $0xf40] sm:$0xff]
    %v542 = vld [vmem:[#allocation5 + $0xf48] sm:$0xff]
    %v543 = vld [vmem:[#allocation5 + $0xf50] sm:$0xff]
    %v544 = vld [vmem:[#allocation5 + $0xf58] sm:$0xff]
    %v545 = vld [vmem:[#allocation5 + $0xf60] sm:$0xff]
    %v546 = vld [vmem:[#allocation5 + $0xf68] sm:$0xff]
    %v547 = vld [vmem:[#allocation5 + $0xf70] sm:$0xff]
    %v548 = vld [vmem:[#allocation5 + $0xf78] sm:$0xff]
    %v549 = vld [vmem:[#allocation5 + $0xf80] sm:$0xff]
    %v550 = vld [vmem:[#allocation5 + $0xf88] sm:$0xff]
    %v551 = vld [vmem:[#allocation5 + $0xf90] sm:$0xff]
    %v552 = vld [vmem:[#allocation5 + $0xf98] sm:$0xff]
    %v553 = vld [vmem:[#allocation5 + $0xfa0] sm:$0xff]
    %v554 = vld [vmem:[#allocation5 + $0xfa8] sm:$0xff]
    %v555 = vld [vmem:[#allocation5 + $0xfb0] sm:$0xff]
    %v556 = vld [vmem:[#allocation5 + $0xfb8] sm:$0xff]
    %v557 = vld [vmem:[#allocation5 + $0xfc0] sm:$0xff]
    %v558 = vld [vmem:[#allocation5 + $0xfc8] sm:$0xff]
    %v559 = vld [vmem:[#allocation5 + $0xfd0] sm:$0xff]
    %v560 = vld [vmem:[#allocation5 + $0xfd8] sm:$0xff]
    %v561 = vld [vmem:[#allocation5 + $0xfe0] sm:$0xff]
    %v562 = vld [vmem:[#allocation5 + $0xfe8] sm:$0xff]
    %v563 = vld [vmem:[#allocation5 + $0xff0] sm:$0xff]
    %v564 = vld [vmem:[#allocation5 + $0xff8] sm:$0xff]
    %v565 = vld [vmem:[#allocation5 + $0x1000] sm:$0xff]
    %v566 = vld [vmem:[#allocation5 + $0x1008] sm:$0xff]
    %v567 = vld [vmem:[#allocation5 + $0x1010] sm:$0xff]
    %v568 = vld [vmem:[#allocation5 + $0x1018] sm:$0xff]
    %v569 = vld [vmem:[#allocation5 + $0x1020] sm:$0xff]
    %v570 = vld [vmem:[#allocation5 + $0x1028] sm:$0xff]
    %v571 = vld [vmem:[#allocation5 + $0x1030] sm:$0xff]
    %v572 = vld [vmem:[#allocation5 + $0x1038] sm:$0xff]
    %v573 = vld [vmem:[#allocation5 + $0x1040] sm:$0xff]
    %v574 = vld [vmem:[#allocation5 + $0x1048] sm:$0xff]
    %v575 = vld [vmem:[#allocation5 + $0x1050] sm:$0xff]
    %v576 = vld [vmem:[#allocation5 + $0x1058] sm:$0xff]
    %v577 = vld [vmem:[#allocation5 + $0x1060] sm:$0xff]
    %v578 = vld [vmem:[#allocation5 + $0x1068] sm:$0xff]
    %v579 = vld [vmem:[#allocation5 + $0x1070] sm:$0xff]
    %v580 = vld [vmem:[#allocation5 + $0x1078] sm:$0xff]
    %v581 = vld [vmem:[#allocation5 + $0x1080] sm:$0xff]
    %v582 = vld [vmem:[#allocation5 + $0x1088] sm:$0xff]
    %v583 = vld [vmem:[#allocation5 + $0x1090] sm:$0xff]
    %v584 = vld [vmem:[#allocation5 + $0x1098] sm:$0xff]
    %v585 = vld [vmem:[#allocation5 + $0x10a0] sm:$0xff]
    %v586 = vld [vmem:[#allocation5 + $0x10a8] sm:$0xff]
    %v587 = vld [vmem:[#allocation5 + $0x10b0] sm:$0xff]
    %v588 = vld [vmem:[#allocation5 + $0x10b8] sm:$0xff]
    %v589 = vld [vmem:[#allocation5 + $0x10c0] sm:$0xff]
    %v590 = vld [vmem:[#allocation5 + $0x10c8] sm:$0xff]
    %v591 = vld [vmem:[#allocation5 + $0x10d0] sm:$0xff]
    %v592 = vld [vmem:[#allocation5 + $0x10d8] sm:$0xff]
    %v593 = vld [vmem:[#allocation5 + $0x10e0] sm:$0xff]
    %v594 = vld [vmem:[#allocation5 + $0x10e8] sm:$0xff]
    %v595 = vld [vmem:[#allocation5 + $0x10f0] sm:$0xff]
    %v596 = vld [vmem:[#allocation5 + $0x10f8] sm:$0xff]
    %v597 = vld [vmem:[#allocation5 + $0x1100] sm:$0xff]
    %v598 = vld [vmem:[#allocation5 + $0x1108] sm:$0xff]
    %v599 = vld [vmem:[#allocation5 + $0x1110] sm:$0xff]
    %v600 = vld [vmem:[#allocation5 + $0x1118] sm:$0xff]
    %v601 = vld [vmem:[#allocation5 + $0x1120] sm:$0xff]
    %v602 = vld [vmem:[#allocation5 + $0x1128] sm:$0xff]
    %v603 = vld [vmem:[#allocation5 + $0x1130] sm:$0xff]
    %v604 = vld [vmem:[#allocation5 + $0x1138] sm:$0xff]
    %v605 = vld [vmem:[#allocation5 + $0x1140] sm:$0xff]
    %v606 = vld [vmem:[#allocation5 + $0x1148] sm:$0xff]
    %v607 = vld [vmem:[#allocation5 + $0x1150] sm:$0xff]
    %v608 = vld [vmem:[#allocation5 + $0x1158] sm:$0xff]
    %v609 = vld [vmem:[#allocation5 + $0x1160] sm:$0xff]
    %v610 = vld [vmem:[#allocation5 + $0x1168] sm:$0xff]
    %v611 = vld [vmem:[#allocation5 + $0x1170] sm:$0xff]
    %v612 = vld [vmem:[#allocation5 + $0x1178] sm:$0xff]
    %v613 = vld [vmem:[#allocation5 + $0x1180] sm:$0xff]
    %v614 = vld [vmem:[#allocation5 + $0x1188] sm:$0xff]
    %v615 = vld [vmem:[#allocation5 + $0x1190] sm:$0xff]
    %v616 = vld [vmem:[#allocation5 + $0x1198] sm:$0xff]
    %v617 = vld [vmem:[#allocation5 + $0x11a0] sm:$0xff]
    %v618 = vld [vmem:[#allocation5 + $0x11a8] sm:$0xff]
    %v619 = vld [vmem:[#allocation5 + $0x11b0] sm:$0xff]
    %v620 = vld [vmem:[#allocation5 + $0x11b8] sm:$0xff]
    %v621 = vld [vmem:[#allocation5 + $0x11c0] sm:$0xff]
    %v622 = vld [vmem:[#allocation5 + $0x11c8] sm:$0xff]
    %v623 = vld [vmem:[#allocation5 + $0x11d0] sm:$0xff]
    %v624 = vld [vmem:[#allocation5 + $0x11d8] sm:$0xff]
    %v625 = vld [vmem:[#allocation5 + $0x11e0] sm:$0xff]
    %v626 = vld [vmem:[#allocation5 + $0x11e8] sm:$0xff]
    %v627 = vld [vmem:[#allocation5 + $0x11f0] sm:$0xff]
    %v628 = vld [vmem:[#allocation5 + $0x11f8] sm:$0xff]
    %v629 = vld [vmem:[#allocation5 + $0x1200] sm:$0xff]
    %v630 = vld [vmem:[#allocation5 + $0x1208] sm:$0xff]
    %v631 = vld [vmem:[#allocation5 + $0x1210] sm:$0xff]
    %v632 = vld [vmem:[#allocation5 + $0x1218] sm:$0xff]
    %v633 = vld [vmem:[#allocation5 + $0x1220] sm:$0xff]
    %v634 = vld [vmem:[#allocation5 + $0x1228] sm:$0xff]
    %v635 = vld [vmem:[#allocation5 + $0x1230] sm:$0xff]
    %v636 = vld [vmem:[#allocation5 + $0x1238] sm:$0xff]
    %v637 = vld [vmem:[#allocation5 + $0x1240] sm:$0xff]
    %v638 = vld [vmem:[#allocation5 + $0x1248] sm:$0xff]
    %v639 = vld [vmem:[#allocation5 + $0x1250] sm:$0xff]
    %v640 = vld [vmem:[#allocation5 + $0x1258] sm:$0xff]
    %v641 = vld [vmem:[#allocation5 + $0x1260] sm:$0xff]
    %v642 = vld [vmem:[#allocation5 + $0x1268] sm:$0xff]
    %v643 = vld [vmem:[#allocation5 + $0x1270] sm:$0xff]
    %v644 = vld [vmem:[#allocation5 + $0x1278] sm:$0xff]
    %v645 = vld [vmem:[#allocation5 + $0x1280] sm:$0xff]
    %v646 = vld [vmem:[#allocation5 + $0x1288] sm:$0xff]
    %v647 = vld [vmem:[#allocation5 + $0x1290] sm:$0xff]
    %v648 = vld [vmem:[#allocation5 + $0x1298] sm:$0xff]
    %v649 = vld [vmem:[#allocation5 + $0x12a0] sm:$0xff]
    %v650 = vld [vmem:[#allocation5 + $0x12a8] sm:$0xff]
    %v651 = vld [vmem:[#allocation5 + $0x12b0] sm:$0xff]
    %v652 = vld [vmem:[#allocation5 + $0x12b8] sm:$0xff]
    %v653 = vld [vmem:[#allocation5 + $0x12c0] sm:$0xff]
    %v654 = vld [vmem:[#allocation5 + $0x12c8] sm:$0xff]
    %v655 = vld [vmem:[#allocation5 + $0x12d0] sm:$0xff]
    %v656 = vld [vmem:[#allocation5 + $0x12d8] sm:$0xff]
    %v657 = vld [vmem:[#allocation5 + $0x12e0] sm:$0xff]
    %v658 = vld [vmem:[#allocation5 + $0x12e8] sm:$0xff]
    %v659 = vld [vmem:[#allocation5 + $0x12f0] sm:$0xff]
    %v660 = vld [vmem:[#allocation5 + $0x12f8] sm:$0xff]
    %v661 = vld [vmem:[#allocation5 + $0x1300] sm:$0xff]
    %v662 = vld [vmem:[#allocation5 + $0x1308] sm:$0xff]
    %v663 = vld [vmem:[#allocation5 + $0x1310] sm:$0xff]
    %v664 = vld [vmem:[#allocation5 + $0x1318] sm:$0xff]
    %v665 = vld [vmem:[#allocation5 + $0x1320] sm:$0xff]
    %v666 = vld [vmem:[#allocation5 + $0x1328] sm:$0xff]
    %v667 = vld [vmem:[#allocation5 + $0x1330] sm:$0xff]
    %v668 = vld [vmem:[#allocation5 + $0x1338] sm:$0xff]
    %v669 = vld [vmem:[#allocation5 + $0x1340] sm:$0xff]
    %v670 = vld [vmem:[#allocation5 + $0x1348] sm:$0xff]
    %v671 = vld [vmem:[#allocation5 + $0x1350] sm:$0xff]
    %v672 = vld [vmem:[#allocation5 + $0x1358] sm:$0xff]
    %v673 = vld [vmem:[#allocation5 + $0x1360] sm:$0xff]
    %v674 = vld [vmem:[#allocation5 + $0x1368] sm:$0xff]
    %v675 = vld [vmem:[#allocation5 + $0x1370] sm:$0xff]
    %v676 = vld [vmem:[#allocation5 + $0x1378] sm:$0xff]
    %v677 = vld [vmem:[#allocation5 + $0x1380] sm:$0xff]
    %v678 = vld [vmem:[#allocation5 + $0x1388] sm:$0xff]
    %v679 = vld [vmem:[#allocation5 + $0x1390] sm:$0xff]
    %v680 = vld [vmem:[#allocation5 + $0x1398] sm:$0xff]
    %v681 = vld [vmem:[#allocation5 + $0x13a0] sm:$0xff]
    %v682 = vld [vmem:[#allocation5 + $0x13a8] sm:$0xff]
    %v683 = vld [vmem:[#allocation5 + $0x13b0] sm:$0xff]
    %v684 = vld [vmem:[#allocation5 + $0x13b8] sm:$0xff]
    %v685 = vld [vmem:[#allocation5 + $0x13c0] sm:$0xff]
    %v686 = vld [vmem:[#allocation5 + $0x13c8] sm:$0xff]
    %v687 = vld [vmem:[#allocation5 + $0x13d0] sm:$0xff]
    %v688 = vld [vmem:[#allocation5 + $0x13d8] sm:$0xff]
    %v689 = vld [vmem:[#allocation5 + $0x13e0] sm:$0xff]
    %v690 = vld [vmem:[#allocation5 + $0x13e8] sm:$0xff]
    %v691 = vld [vmem:[#allocation5 + $0x13f0] sm:$0xff]
    %v692 = vld [vmem:[#allocation5 + $0x13f8] sm:$0xff]
    %v693 = vld [vmem:[#allocation5 + $0x1400] sm:$0xff]
    %v694 = vld [vmem:[#allocation5 + $0x1408] sm:$0xff]
    %v695 = vld [vmem:[#allocation5 + $0x1410] sm:$0xff]
    %v696 = vld [vmem:[#allocation5 + $0x1418] sm:$0xff]
    %v697 = vld [vmem:[#allocation5 + $0x1420] sm:$0xff]
    %v698 = vld [vmem:[#allocation5 + $0x1428] sm:$0xff]
    %v699 = vld [vmem:[#allocation5 + $0x1430] sm:$0xff]
    %v700 = vld [vmem:[#allocation5 + $0x1438] sm:$0xff]
    %v701 = vld [vmem:[#allocation5 + $0x1440] sm:$0xff]
    %v702 = vld [vmem:[#allocation5 + $0x1448] sm:$0xff]
    %v703 = vld [vmem:[#allocation5 + $0x1450] sm:$0xff]
    %v704 = vld [vmem:[#allocation5 + $0x1458] sm:$0xff]
    %v705 = vld [vmem:[#allocation5 + $0x1460] sm:$0xff]
    %v706 = vld [vmem:[#allocation5 + $0x1468] sm:$0xff]
    %v707 = vld [vmem:[#allocation5 + $0x1470] sm:$0xff]
    %v708 = vld [vmem:[#allocation5 + $0x1478] sm:$0xff]
    %v709 = vld [vmem:[#allocation5 + $0x1480] sm:$0xff]
    %v710 = vld [vmem:[#allocation5 + $0x1488] sm:$0xff]
    %v711 = vld [vmem:[#allocation5 + $0x1490] sm:$0xff]
    %v712 = vld [vmem:[#allocation5 + $0x1498] sm:$0xff]
    %v713 = vld [vmem:[#allocation5 + $0x14a0] sm:$0xff]
    %v714 = vld [vmem:[#allocation5 + $0x14a8] sm:$0xff]
    %v715 = vld [vmem:[#allocation5 + $0x14b0] sm:$0xff]
    %v716 = vld [vmem:[#allocation5 + $0x14b8] sm:$0xff]
    %v717 = vld [vmem:[#allocation5 + $0x14c0] sm:$0xff]
    %v718 = vld [vmem:[#allocation5 + $0x14c8] sm:$0xff]
    %v719 = vld [vmem:[#allocation5 + $0x14d0] sm:$0xff]
    %v720 = vld [vmem:[#allocation5 + $0x14d8] sm:$0xff]
    %v721 = vld [vmem:[#allocation5 + $0x14e0] sm:$0xff]
    %v722 = vld [vmem:[#allocation5 + $0x14e8] sm:$0xff]
    %v723 = vld [vmem:[#allocation5 + $0x14f0] sm:$0xff]
    %v724 = vld [vmem:[#allocation5 + $0x14f8] sm:$0xff]
    %v725 = vld [vmem:[#allocation5 + $0x1500] sm:$0xff]
    %v726 = vld [vmem:[#allocation5 + $0x1508] sm:$0xff]
    %v727 = vld [vmem:[#allocation5 + $0x1510] sm:$0xff]
    %v728 = vld [vmem:[#allocation5 + $0x1518] sm:$0xff]
    %v729 = vld [vmem:[#allocation5 + $0x1520] sm:$0xff]
    %v730 = vld [vmem:[#allocation5 + $0x1528] sm:$0xff]
    %v731 = vld [vmem:[#allocation5 + $0x1530] sm:$0xff]
    %v732 = vld [vmem:[#allocation5 + $0x1538] sm:$0xff]
    %v733 = vld [vmem:[#allocation5 + $0x1540] sm:$0xff]
    %v734 = vld [vmem:[#allocation5 + $0x1548] sm:$0xff]
    %v735 = vld [vmem:[#allocation5 + $0x1550] sm:$0xff]
    %v736 = vld [vmem:[#allocation5 + $0x1558] sm:$0xff]
    %v737 = vld [vmem:[#allocation5 + $0x1560] sm:$0xff]
    %v738 = vld [vmem:[#allocation5 + $0x1568] sm:$0xff]
    %v739 = vld [vmem:[#allocation5 + $0x1570] sm:$0xff]
    %v740 = vld [vmem:[#allocation5 + $0x1578] sm:$0xff]
    %v741 = vld [vmem:[#allocation5 + $0x1580] sm:$0xff]
    %v742 = vld [vmem:[#allocation5 + $0x1588] sm:$0xff]
    %v743 = vld [vmem:[#allocation5 + $0x1590] sm:$0xff]
    %v744 = vld [vmem:[#allocation5 + $0x1598] sm:$0xff]
    %v745 = vld [vmem:[#allocation5 + $0x15a0] sm:$0xff]
    %v746 = vld [vmem:[#allocation5 + $0x15a8] sm:$0xff]
    %v747 = vld [vmem:[#allocation5 + $0x15b0] sm:$0xff]
    %v748 = vld [vmem:[#allocation5 + $0x15b8] sm:$0xff]
    %v749 = vld [vmem:[#allocation5 + $0x15c0] sm:$0xff]
    %v750 = vld [vmem:[#allocation5 + $0x15c8] sm:$0xff]
    %v751 = vld [vmem:[#allocation5 + $0x15d0] sm:$0xff]
    %v752 = vld [vmem:[#allocation5 + $0x15d8] sm:$0xff]
    %v753 = vld [vmem:[#allocation5 + $0x15e0] sm:$0xff]
    %v754 = vld [vmem:[#allocation5 + $0x15e8] sm:$0xff]
    %v755 = vld [vmem:[#allocation5 + $0x15f0] sm:$0xff]
    %v756 = vld [vmem:[#allocation5 + $0x15f8] sm:$0xff]
    %v757 = vld [vmem:[#allocation5 + $0x1600] sm:$0xff]
    %v758 = vld [vmem:[#allocation5 + $0x1608] sm:$0xff]
    %v759 = vld [vmem:[#allocation5 + $0x1610] sm:$0xff]
    %v760 = vld [vmem:[#allocation5 + $0x1618] sm:$0xff]
    %v761 = vld [vmem:[#allocation5 + $0x1620] sm:$0xff]
    %v762 = vld [vmem:[#allocation5 + $0x1628] sm:$0xff]
    %v763 = vld [vmem:[#allocation5 + $0x1630] sm:$0xff]
    %v764 = vld [vmem:[#allocation5 + $0x1638] sm:$0xff]
    %v765 = vld [vmem:[#allocation5 + $0x1640] sm:$0xff]
    %v766 = vld [vmem:[#allocation5 + $0x1648] sm:$0xff]
    %v767 = vld [vmem:[#allocation5 + $0x1650] sm:$0xff]
    %v768 = vld [vmem:[#allocation5 + $0x1658] sm:$0xff]
    %v769 = vld [vmem:[#allocation5 + $0x1660] sm:$0xff]
    %v770 = vld [vmem:[#allocation5 + $0x1668] sm:$0xff]
    %v771 = vld [vmem:[#allocation5 + $0x1670] sm:$0xff]
    %v772 = vld [vmem:[#allocation5 + $0x1678] sm:$0xff]
    %v773 = vld [vmem:[#allocation5 + $0x1680] sm:$0xff]
    %v774 = vld [vmem:[#allocation5 + $0x1688] sm:$0xff]
    %v775 = vld [vmem:[#allocation5 + $0x1690] sm:$0xff]
    %v776 = vld [vmem:[#allocation5 + $0x1698] sm:$0xff]
    %v777 = vld [vmem:[#allocation5 + $0x16a0] sm:$0xff]
    %v778 = vld [vmem:[#allocation5 + $0x16a8] sm:$0xff]
    %v779 = vld [vmem:[#allocation5 + $0x16b0] sm:$0xff]
    %v780 = vld [vmem:[#allocation5 + $0x16b8] sm:$0xff]
    %v781 = vld [vmem:[#allocation5 + $0x16c0] sm:$0xff]
    %v782 = vld [vmem:[#allocation5 + $0x16c8] sm:$0xff]
    %v783 = vld [vmem:[#allocation5 + $0x16d0] sm:$0xff]
    %v784 = vld [vmem:[#allocation5 + $0x16d8] sm:$0xff]
    %v785 = vld [vmem:[#allocation5 + $0x16e0] sm:$0xff]
    %v786 = vld [vmem:[#allocation5 + $0x16e8] sm:$0xff]
    %v787 = vld [vmem:[#allocation5 + $0x16f0] sm:$0xff]
    %v788 = vld [vmem:[#allocation5 + $0x16f8] sm:$0xff]
    %v789 = vld [vmem:[#allocation5 + $0x1700] sm:$0xff]
    %v790 = vld [vmem:[#allocation5 + $0x1708] sm:$0xff]
    %v791 = vld [vmem:[#allocation5 + $0x1710] sm:$0xff]
    %v792 = vld [vmem:[#allocation5 + $0x1718] sm:$0xff]
    %v793 = vld [vmem:[#allocation5 + $0x1720] sm:$0xff]
    %v794 = vld [vmem:[#allocation5 + $0x1728] sm:$0xff]
    %v795 = vld [vmem:[#allocation5 + $0x1730] sm:$0xff]
    %v796 = vld [vmem:[#allocation5 + $0x1738] sm:$0xff]
    %v797 = vld [vmem:[#allocation5 + $0x1740] sm:$0xff]
    %v798 = vld [vmem:[#allocation5 + $0x1748] sm:$0xff]
    %v799 = vld [vmem:[#allocation5 + $0x1750] sm:$0xff]
    %v800 = vld [vmem:[#allocation5 + $0x1758] sm:$0xff]
    %v801 = vld [vmem:[#allocation5 + $0x1760] sm:$0xff]
    %v802 = vld [vmem:[#allocation5 + $0x1768] sm:$0xff]
    %v803 = vld [vmem:[#allocation5 + $0x1770] sm:$0xff]
    %v804 = vld [vmem:[#allocation5 + $0x1778] sm:$0xff]
    %v805 = vld [vmem:[#allocation5 + $0x1780] sm:$0xff]
    %v806 = vld [vmem:[#allocation5 + $0x1788] sm:$0xff]
    %v807 = vld [vmem:[#allocation5 + $0x1790] sm:$0xff]
    %v808 = vld [vmem:[#allocation5 + $0x1798] sm:$0xff]
    %v809 = vld [vmem:[#allocation5 + $0x17a0] sm:$0xff]
    %v810 = vld [vmem:[#allocation5 + $0x17a8] sm:$0xff]
    %v811 = vld [vmem:[#allocation5 + $0x17b0] sm:$0xff]
    %v812 = vld [vmem:[#allocation5 + $0x17b8] sm:$0xff]
    %v813 = vld [vmem:[#allocation5 + $0x17c0] sm:$0xff]
    %v814 = vld [vmem:[#allocation5 + $0x17c8] sm:$0xff]
    %v815 = vld [vmem:[#allocation5 + $0x17d0] sm:$0xff]
    %v816 = vld [vmem:[#allocation5 + $0x17d8] sm:$0xff]
    %v817 = vld [vmem:[#allocation5 + $0x17e0] sm:$0xff]
    %v818 = vld [vmem:[#allocation5 + $0x17e8] sm:$0xff]
    %v819 = vld [vmem:[#allocation5 + $0x17f0] sm:$0xff]
    %v820 = vld [vmem:[#allocation5 + $0x17f8] sm:$0xff]
    %v821 = vld [vmem:[#allocation5 + $0x1800] sm:$0xff]
    %v822 = vld [vmem:[#allocation5 + $0x1808] sm:$0xff]
    %v823 = vld [vmem:[#allocation5 + $0x1810] sm:$0xff]
    %v824 = vld [vmem:[#allocation5 + $0x1818] sm:$0xff]
    %v825 = vld [vmem:[#allocation5 + $0x1820] sm:$0xff]
    %v826 = vld [vmem:[#allocation5 + $0x1828] sm:$0xff]
    %v827 = vld [vmem:[#allocation5 + $0x1830] sm:$0xff]
    %v828 = vld [vmem:[#allocation5 + $0x1838] sm:$0xff]
    %v829 = vld [vmem:[#allocation5 + $0x1840] sm:$0xff]
    %v830 = vld [vmem:[#allocation5 + $0x1848] sm:$0xff]
    %v831 = vld [vmem:[#allocation5 + $0x1850] sm:$0xff]
    %v832 = vld [vmem:[#allocation5 + $0x1858] sm:$0xff]
    %v833 = vld [vmem:[#allocation5 + $0x1860] sm:$0xff]
    %v834 = vld [vmem:[#allocation5 + $0x1868] sm:$0xff]
    %v835 = vld [vmem:[#allocation5 + $0x1870] sm:$0xff]
    %v836 = vld [vmem:[#allocation5 + $0x1878] sm:$0xff]
    %v837 = vld [vmem:[#allocation5 + $0x1880] sm:$0xff]
    %v838 = vld [vmem:[#allocation5 + $0x1888] sm:$0xff]
    %v839 = vld [vmem:[#allocation5 + $0x1890] sm:$0xff]
    %v840 = vld [vmem:[#allocation5 + $0x1898] sm:$0xff]
    %v841 = vld [vmem:[#allocation5 + $0x18a0] sm:$0xff]
    %v842 = vld [vmem:[#allocation5 + $0x18a8] sm:$0xff]
    %v843 = vld [vmem:[#allocation5 + $0x18b0] sm:$0xff]
    %v844 = vld [vmem:[#allocation5 + $0x18b8] sm:$0xff]
    %v845 = vld [vmem:[#allocation5 + $0x18c0] sm:$0xff]
    %v846 = vld [vmem:[#allocation5 + $0x18c8] sm:$0xff]
    %v847 = vld [vmem:[#allocation5 + $0x18d0] sm:$0xff]
    %v848 = vld [vmem:[#allocation5 + $0x18d8] sm:$0xff]
    %v849 = vld [vmem:[#allocation5 + $0x18e0] sm:$0xff]
    %v850 = vld [vmem:[#allocation5 + $0x18e8] sm:$0xff]
    %v851 = vld [vmem:[#allocation5 + $0x18f0] sm:$0xff]
    %v852 = vld [vmem:[#allocation5 + $0x18f8] sm:$0xff]
    %v853 = vld [vmem:[#allocation5 + $0x1900] sm:$0xff]
    %v854 = vld [vmem:[#allocation5 + $0x1908] sm:$0xff]
    %v855 = vld [vmem:[#allocation5 + $0x1910] sm:$0xff]
    %v856 = vld [vmem:[#allocation5 + $0x1918] sm:$0xff]
    %v857 = vld [vmem:[#allocation5 + $0x1920] sm:$0xff]
    %v858 = vld [vmem:[#allocation5 + $0x1928] sm:$0xff]
    %v859 = vld [vmem:[#allocation5 + $0x1930] sm:$0xff]
    %v860 = vld [vmem:[#allocation5 + $0x1938] sm:$0xff]
    %v861 = vld [vmem:[#allocation5 + $0x1940] sm:$0xff]
    %v862 = vld [vmem:[#allocation5 + $0x1948] sm:$0xff]
    %v863 = vld [vmem:[#allocation5 + $0x1950] sm:$0xff]
    %v864 = vld [vmem:[#allocation5 + $0x1958] sm:$0xff]
    %v865 = vld [vmem:[#allocation5 + $0x1960] sm:$0xff]
    %v866 = vld [vmem:[#allocation5 + $0x1968] sm:$0xff]
    %v867 = vld [vmem:[#allocation5 + $0x1970] sm:$0xff]
    %v868 = vld [vmem:[#allocation5 + $0x1978] sm:$0xff]
    %v869 = vld [vmem:[#allocation5 + $0x1980] sm:$0xff]
    %v870 = vld [vmem:[#allocation5 + $0x1988] sm:$0xff]
    %v871 = vld [vmem:[#allocation5 + $0x1990] sm:$0xff]
    %v872 = vld [vmem:[#allocation5 + $0x1998] sm:$0xff]
    %v873 = vld [vmem:[#allocation5 + $0x19a0] sm:$0xff]
    %v874 = vld [vmem:[#allocation5 + $0x19a8] sm:$0xff]
    %v875 = vld [vmem:[#allocation5 + $0x19b0] sm:$0xff]
    %v876 = vld [vmem:[#allocation5 + $0x19b8] sm:$0xff]
    %v877 = vld [vmem:[#allocation5 + $0x19c0] sm:$0xff]
    %v878 = vld [vmem:[#allocation5 + $0x19c8] sm:$0xff]
    %v879 = vld [vmem:[#allocation5 + $0x19d0] sm:$0xff]
    %v880 = vld [vmem:[#allocation5 + $0x19d8] sm:$0xff]
    %v881 = vld [vmem:[#allocation5 + $0x19e0] sm:$0xff]
    %v882 = vld [vmem:[#allocation5 + $0x19e8] sm:$0xff]
    %v883 = vld [vmem:[#allocation5 + $0x19f0] sm:$0xff]
    %v884 = vld [vmem:[#allocation5 + $0x19f8] sm:$0xff]
    %v885 = vld [vmem:[#allocation5 + $0x1a00] sm:$0xff]
    %v886 = vld [vmem:[#allocation5 + $0x1a08] sm:$0xff]
    %v887 = vld [vmem:[#allocation5 + $0x1a10] sm:$0xff]
    %v888 = vld [vmem:[#allocation5 + $0x1a18] sm:$0xff]
    %v889 = vld [vmem:[#allocation5 + $0x1a20] sm:$0xff]
    %v890 = vld [vmem:[#allocation5 + $0x1a28] sm:$0xff]
    %v891 = vld [vmem:[#allocation5 + $0x1a30] sm:$0xff]
    %v892 = vld [vmem:[#allocation5 + $0x1a38] sm:$0xff]
    %v893 = vld [vmem:[#allocation5 + $0x1a40] sm:$0xff]
    %v894 = vld [vmem:[#allocation5 + $0x1a48] sm:$0xff]
    %v895 = vld [vmem:[#allocation5 + $0x1a50] sm:$0xff]
    %v896 = vld [vmem:[#allocation5 + $0x1a58] sm:$0xff]
    %v897 = vld [vmem:[#allocation5 + $0x1a60] sm:$0xff]
    %v898 = vld [vmem:[#allocation5 + $0x1a68] sm:$0xff]
    %v899 = vld [vmem:[#allocation5 + $0x1a70] sm:$0xff]
    %v900 = vld [vmem:[#allocation5 + $0x1a78] sm:$0xff]
    %v901 = vld [vmem:[#allocation5 + $0x1a80] sm:$0xff]
    %v902 = vld [vmem:[#allocation5 + $0x1a88] sm:$0xff]
    %v903 = vld [vmem:[#allocation5 + $0x1a90] sm:$0xff]
    %v904 = vld [vmem:[#allocation5 + $0x1a98] sm:$0xff]
    %v905 = vld [vmem:[#allocation5 + $0x1aa0] sm:$0xff]
    %v906 = vld [vmem:[#allocation5 + $0x1aa8] sm:$0xff]
    %v907 = vld [vmem:[#allocation5 + $0x1ab0] sm:$0xff]
    %v908 = vld [vmem:[#allocation5 + $0x1ab8] sm:$0xff]
    %v909 = vld [vmem:[#allocation5 + $0x1ac0] sm:$0xff]
    %v910 = vld [vmem:[#allocation5 + $0x1ac8] sm:$0xff]
    %v911 = vld [vmem:[#allocation5 + $0x1ad0] sm:$0xff]
    %v912 = vld [vmem:[#allocation5 + $0x1ad8] sm:$0xff]
    %v913 = vld [vmem:[#allocation5 + $0x1ae0] sm:$0xff]
    %v914 = vld [vmem:[#allocation5 + $0x1ae8] sm:$0xff]
    %v915 = vld [vmem:[#allocation5 + $0x1af0] sm:$0xff]
    %v916 = vld [vmem:[#allocation5 + $0x1af8] sm:$0xff]
    %v917 = vld [vmem:[#allocation5 + $0x1b00] sm:$0xff]
    %v918 = vld [vmem:[#allocation5 + $0x1b08] sm:$0xff]
    %v919 = vld [vmem:[#allocation5 + $0x1b10] sm:$0xff]
    %v920 = vld [vmem:[#allocation5 + $0x1b18] sm:$0xff]
    %v921 = vld [vmem:[#allocation5 + $0x1b20] sm:$0xff]
    %v922 = vld [vmem:[#allocation5 + $0x1b28] sm:$0xff]
    %v923 = vld [vmem:[#allocation5 + $0x1b30] sm:$0xff]
    %v924 = vld [vmem:[#allocation5 + $0x1b38] sm:$0xff]
    %v925 = vld [vmem:[#allocation5 + $0x1b40] sm:$0xff]
    %v926 = vld [vmem:[#allocation5 + $0x1b48] sm:$0xff]
    %v927 = vld [vmem:[#allocation5 + $0x1b50] sm:$0xff]
    %v928 = vld [vmem:[#allocation5 + $0x1b58] sm:$0xff]
    %v929 = vld [vmem:[#allocation5 + $0x1b60] sm:$0xff]
    %v930 = vld [vmem:[#allocation5 + $0x1b68] sm:$0xff]
    %v931 = vld [vmem:[#allocation5 + $0x1b70] sm:$0xff]
    %v932 = vld [vmem:[#allocation5 + $0x1b78] sm:$0xff]
    %v933 = vld [vmem:[#allocation5 + $0x1b80] sm:$0xff]
    %v934 = vld [vmem:[#allocation5 + $0x1b88] sm:$0xff]
    %v935 = vld [vmem:[#allocation5 + $0x1b90] sm:$0xff]
    %v936 = vld [vmem:[#allocation5 + $0x1b98] sm:$0xff]
    %v937 = vld [vmem:[#allocation5 + $0x1ba0] sm:$0xff]
    %v938 = vld [vmem:[#allocation5 + $0x1ba8] sm:$0xff]
    %v939 = vld [vmem:[#allocation5 + $0x1bb0] sm:$0xff]
    %v940 = vld [vmem:[#allocation5 + $0x1bb8] sm:$0xff]
    %v941 = vld [vmem:[#allocation5 + $0x1bc0] sm:$0xff]
    %v942 = vld [vmem:[#allocation5 + $0x1bc8] sm:$0xff]
    %v943 = vld [vmem:[#allocation5 + $0x1bd0] sm:$0xff]
    %v944 = vld [vmem:[#allocation5 + $0x1bd8] sm:$0xff]
    %v945 = vld [vmem:[#allocation5 + $0x1be0] sm:$0xff]
    %v946 = vld [vmem:[#allocation5 + $0x1be8] sm:$0xff]
    %v947 = vld [vmem:[#allocation5 + $0x1bf0] sm:$0xff]
    %v948 = vld [vmem:[#allocation5 + $0x1bf8] sm:$0xff]
    %v949 = vld [vmem:[#allocation5 + $0x1c00] sm:$0xff]
    %v950 = vld [vmem:[#allocation5 + $0x1c08] sm:$0xff]
    %v951 = vld [vmem:[#allocation5 + $0x1c10] sm:$0xff]
    %v952 = vld [vmem:[#allocation5 + $0x1c18] sm:$0xff]
    %v953 = vld [vmem:[#allocation5 + $0x1c20] sm:$0xff]
    %v954 = vld [vmem:[#allocation5 + $0x1c28] sm:$0xff]
    %v955 = vld [vmem:[#allocation5 + $0x1c30] sm:$0xff]
    %v956 = vld [vmem:[#allocation5 + $0x1c38] sm:$0xff]
    %v957 = vld [vmem:[#allocation5 + $0x1c40] sm:$0xff]
    %v958 = vld [vmem:[#allocation5 + $0x1c48] sm:$0xff]
    %v959 = vld [vmem:[#allocation5 + $0x1c50] sm:$0xff]
    %v960 = vld [vmem:[#allocation5 + $0x1c58] sm:$0xff]
    %v961 = vld [vmem:[#allocation5 + $0x1c60] sm:$0xff]
    %v962 = vld [vmem:[#allocation5 + $0x1c68] sm:$0xff]
    %v963 = vld [vmem:[#allocation5 + $0x1c70] sm:$0xff]
    %v964 = vld [vmem:[#allocation5 + $0x1c78] sm:$0xff]
    %v965 = vld [vmem:[#allocation5 + $0x1c80] sm:$0xff]
    %v966 = vld [vmem:[#allocation5 + $0x1c88] sm:$0xff]
    %v967 = vld [vmem:[#allocation5 + $0x1c90] sm:$0xff]
    %v968 = vld [vmem:[#allocation5 + $0x1c98] sm:$0xff]
    %v969 = vld [vmem:[#allocation5 + $0x1ca0] sm:$0xff]
    %v970 = vld [vmem:[#allocation5 + $0x1ca8] sm:$0xff]
    %v971 = vld [vmem:[#allocation5 + $0x1cb0] sm:$0xff]
    %v972 = vld [vmem:[#allocation5 + $0x1cb8] sm:$0xff]
    %v973 = vld [vmem:[#allocation5 + $0x1cc0] sm:$0xff]
    %v974 = vld [vmem:[#allocation5 + $0x1cc8] sm:$0xff]
    %v975 = vld [vmem:[#allocation5 + $0x1cd0] sm:$0xff]
    %v976 = vld [vmem:[#allocation5 + $0x1cd8] sm:$0xff]
    %v977 = vld [vmem:[#allocation5 + $0x1ce0] sm:$0xff]
    %v978 = vld [vmem:[#allocation5 + $0x1ce8] sm:$0xff]
    %v979 = vld [vmem:[#allocation5 + $0x1cf0] sm:$0xff]
    %v980 = vld [vmem:[#allocation5 + $0x1cf8] sm:$0xff]
    %v981 = vld [vmem:[#allocation5 + $0x1d00] sm:$0xff]
    %v982 = vld [vmem:[#allocation5 + $0x1d08] sm:$0xff]
    %v983 = vld [vmem:[#allocation5 + $0x1d10] sm:$0xff]
    %v984 = vld [vmem:[#allocation5 + $0x1d18] sm:$0xff]
    %v985 = vld [vmem:[#allocation5 + $0x1d20] sm:$0xff]
    %v986 = vld [vmem:[#allocation5 + $0x1d28] sm:$0xff]
    %v987 = vld [vmem:[#allocation5 + $0x1d30] sm:$0xff]
    %v988 = vld [vmem:[#allocation5 + $0x1d38] sm:$0xff]
    %v989 = vld [vmem:[#allocation5 + $0x1d40] sm:$0xff]
    %v990 = vld [vmem:[#allocation5 + $0x1d48] sm:$0xff]
    %v991 = vld [vmem:[#allocation5 + $0x1d50] sm:$0xff]
    %v992 = vld [vmem:[#allocation5 + $0x1d58] sm:$0xff]
    %v993 = vld [vmem:[#allocation5 + $0x1d60] sm:$0xff]
    %v994 = vld [vmem:[#allocation5 + $0x1d68] sm:$0xff]
    %v995 = vld [vmem:[#allocation5 + $0x1d70] sm:$0xff]
    %v996 = vld [vmem:[#allocation5 + $0x1d78] sm:$0xff]
    %v997 = vld [vmem:[#allocation5 + $0x1d80] sm:$0xff]
    %v998 = vld [vmem:[#allocation5 + $0x1d88] sm:$0xff]
    %v999 = vld [vmem:[#allocation5 + $0x1d90] sm:$0xff]
    %v1000 = vld [vmem:[#allocation5 + $0x1d98] sm:$0xff]
    %v1001 = vld [vmem:[#allocation5 + $0x1da0] sm:$0xff]
    %v1002 = vld [vmem:[#allocation5 + $0x1da8] sm:$0xff]
    %v1003 = vld [vmem:[#allocation5 + $0x1db0] sm:$0xff]
    %v1004 = vld [vmem:[#allocation5 + $0x1db8] sm:$0xff]
    %v1005 = vld [vmem:[#allocation5 + $0x1dc0] sm:$0xff]
    %v1006 = vld [vmem:[#allocation5 + $0x1dc8] sm:$0xff]
    %v1007 = vld [vmem:[#allocation5 + $0x1dd0] sm:$0xff]
    %v1008 = vld [vmem:[#allocation5 + $0x1dd8] sm:$0xff]
    %v1009 = vld [vmem:[#allocation5 + $0x1de0] sm:$0xff]
    %v1010 = vld [vmem:[#allocation5 + $0x1de8] sm:$0xff]
    %v1011 = vld [vmem:[#allocation5 + $0x1df0] sm:$0xff]
    %v1012 = vld [vmem:[#allocation5 + $0x1df8] sm:$0xff]
    %v1013 = vld [vmem:[#allocation5 + $0x1e00] sm:$0xff]
    %v1014 = vld [vmem:[#allocation5 + $0x1e08] sm:$0xff]
    %v1015 = vld [vmem:[#allocation5 + $0x1e10] sm:$0xff]
    %v1016 = vld [vmem:[#allocation5 + $0x1e18] sm:$0xff]
    %v1017 = vld [vmem:[#allocation5 + $0x1e20] sm:$0xff]
    %v1018 = vld [vmem:[#allocation5 + $0x1e28] sm:$0xff]
    %v1019 = vld [vmem:[#allocation5 + $0x1e30] sm:$0xff]
    %v1020 = vld [vmem:[#allocation5 + $0x1e38] sm:$0xff]
    %v1021 = vld [vmem:[#allocation5 + $0x1e40] sm:$0xff]
    %v1022 = vld [vmem:[#allocation5 + $0x1e48] sm:$0xff]
    %v1023 = vld [vmem:[#allocation5 + $0x1e50] sm:$0xff]
    %v1024 = vld [vmem:[#allocation5 + $0x1e58] sm:$0xff]
    %v1025 = vld [vmem:[#allocation5 + $0x1e60] sm:$0xff]
    %v1026 = vld [vmem:[#allocation5 + $0x1e68] sm:$0xff]
    %v1027 = vld [vmem:[#allocation5 + $0x1e70] sm:$0xff]
    %v1028 = vld [vmem:[#allocation5 + $0x1e78] sm:$0xff]
    %v1029 = vld [vmem:[#allocation5 + $0x1e80] sm:$0xff]
    %v1030 = vld [vmem:[#allocation5 + $0x1e88] sm:$0xff]
    %v1031 = vld [vmem:[#allocation5 + $0x1e90] sm:$0xff]
    %v1032 = vld [vmem:[#allocation5 + $0x1e98] sm:$0xff]
    %v1033 = vld [vmem:[#allocation5 + $0x1ea0] sm:$0xff]
    %v1034 = vld [vmem:[#allocation5 + $0x1ea8] sm:$0xff]
    %v1035 = vld [vmem:[#allocation5 + $0x1eb0] sm:$0xff]
    %v1036 = vld [vmem:[#allocation5 + $0x1eb8] sm:$0xff]
    %v1037 = vld [vmem:[#allocation5 + $0x1ec0] sm:$0xff]
    %v1038 = vld [vmem:[#allocation5 + $0x1ec8] sm:$0xff]
    %v1039 = vld [vmem:[#allocation5 + $0x1ed0] sm:$0xff]
    %v1040 = vld [vmem:[#allocation5 + $0x1ed8] sm:$0xff]
    %v1041 = vld [vmem:[#allocation5 + $0x1ee0] sm:$0xff]
    %v1042 = vld [vmem:[#allocation5 + $0x1ee8] sm:$0xff]
    %v1043 = vld [vmem:[#allocation5 + $0x1ef0] sm:$0xff]
    %v1044 = vld [vmem:[#allocation5 + $0x1ef8] sm:$0xff]
    %v1045 = vld [vmem:[#allocation5 + $0x1f00] sm:$0xff]
    %v1046 = vld [vmem:[#allocation5 + $0x1f08] sm:$0xff]
    %v1047 = vld [vmem:[#allocation5 + $0x1f10] sm:$0xff]
    %v1048 = vld [vmem:[#allocation5 + $0x1f18] sm:$0xff]
    %v1049 = vld [vmem:[#allocation5 + $0x1f20] sm:$0xff]
    %v1050 = vld [vmem:[#allocation5 + $0x1f28] sm:$0xff]
    %v1051 = vld [vmem:[#allocation5 + $0x1f30] sm:$0xff]
    %v1052 = vld [vmem:[#allocation5 + $0x1f38] sm:$0xff]
    %v1053 = vld [vmem:[#allocation5 + $0x1f40] sm:$0xff]
    %v1054 = vld [vmem:[#allocation5 + $0x1f48] sm:$0xff]
    %v1055 = vld [vmem:[#allocation5 + $0x1f50] sm:$0xff]
    %v1056 = vld [vmem:[#allocation5 + $0x1f58] sm:$0xff]
    %v1057 = vld [vmem:[#allocation5 + $0x1f60] sm:$0xff]
    %v1058 = vld [vmem:[#allocation5 + $0x1f68] sm:$0xff]
    %v1059 = vld [vmem:[#allocation5 + $0x1f70] sm:$0xff]
    %v1060 = vld [vmem:[#allocation5 + $0x1f78] sm:$0xff]
    %v1061 = vld [vmem:[#allocation5 + $0x1f80] sm:$0xff]
    %v1062 = vld [vmem:[#allocation5 + $0x1f88] sm:$0xff]
    %v1063 = vld [vmem:[#allocation5 + $0x1f90] sm:$0xff]
    %v1064 = vld [vmem:[#allocation5 + $0x1f98] sm:$0xff]
    %v1065 = vld [vmem:[#allocation5 + $0x1fa0] sm:$0xff]
    %v1066 = vld [vmem:[#allocation5 + $0x1fa8] sm:$0xff]
    %v1067 = vld [vmem:[#allocation5 + $0x1fb0] sm:$0xff]
    %v1068 = vld [vmem:[#allocation5 + $0x1fb8] sm:$0xff]
    %v1069 = vld [vmem:[#allocation5 + $0x1fc0] sm:$0xff]
    %v1070 = vld [vmem:[#allocation5 + $0x1fc8] sm:$0xff]
    %v1071 = vld [vmem:[#allocation5 + $0x1fd0] sm:$0xff]
    %v1072 = vld [vmem:[#allocation5 + $0x1fd8] sm:$0xff]
    %v1073 = vld [vmem:[#allocation5 + $0x1fe0] sm:$0xff]
    %v1074 = vld [vmem:[#allocation5 + $0x1fe8] sm:$0xff]
    %v1075 = vld [vmem:[#allocation5 + $0x1ff0] sm:$0xff]
    %v1076 = vld [vmem:[#allocation5 + $0x1ff8] sm:$0xff]
    %v1077 = vld [vmem:[#allocation7] sm:$0xff]
    %v1079 = vlaneseq
    %v1080 = vshrl.u32 %v1079, 7
    %v1081 = vsub.s32 0, %v1080
    %v1082 = vrot.slane %v52, %v1081
    %v1083 = vlaneseq
    %v1084 = vshrl.u32 %v1083, 7
    %v1085 = vsub.s32 1, %v1084
    %v1086 = vrot.slane %v52, %v1085
    %v1087 = vlaneseq
    %v1088 = vshrl.u32 %v1087, 7
    %v1089 = vsub.s32 2, %v1088
    %v1090 = vrot.slane %v52, %v1089
    %v1091 = vlaneseq
    %v1092 = vshrl.u32 %v1091, 7
    %v1093 = vsub.s32 3, %v1092
    %v1094 = vrot.slane %v52, %v1093
    %v1095 = vlaneseq
    %v1096 = vshrl.u32 %v1095, 7
    %v1097 = vsub.s32 4, %v1096
    %v1098 = vrot.slane %v52, %v1097
    %v1099 = vlaneseq
    %v1100 = vshrl.u32 %v1099, 7
    %v1101 = vsub.s32 5, %v1100
    %v1102 = vrot.slane %v52, %v1101
    %v1103 = vlaneseq
    %v1104 = vshrl.u32 %v1103, 7
    %v1105 = vsub.s32 6, %v1104
    %v1106 = vrot.slane %v52, %v1105
    %v1107 = vlaneseq
    %v1108 = vshrl.u32 %v1107, 7
    %v1109 = vsub.s32 7, %v1108
    %v1110 = vrot.slane %v52, %v1109
    %v1120 = vlaneseq
    %v1121 = vshrl.u32 %v1120, 7
    %v1122 = vsub.s32 0, %v1121
    %v1123 = vrot.slane %v1077, %v1122
    %v1124 = vlaneseq
    %v1125 = vshrl.u32 %v1124, 7
    %v1126 = vsub.s32 1, %v1125
    %v1127 = vrot.slane %v1077, %v1126
    %v1128 = vlaneseq
    %v1129 = vshrl.u32 %v1128, 7
    %v1130 = vsub.s32 2, %v1129
    %v1131 = vrot.slane %v1077, %v1130
    %v1132 = vlaneseq
    %v1133 = vshrl.u32 %v1132, 7
    %v1134 = vsub.s32 3, %v1133
    %v1135 = vrot.slane %v1077, %v1134
    %v1136 = vlaneseq
    %v1137 = vshrl.u32 %v1136, 7
    %v1138 = vsub.s32 4, %v1137
    %v1139 = vrot.slane %v1077, %v1138
    %v1140 = vlaneseq
    %v1141 = vshrl.u32 %v1140, 7
    %v1142 = vsub.s32 5, %v1141
    %v1143 = vrot.slane %v1077, %v1142
    %v1144 = vlaneseq
    %v1145 = vshrl.u32 %v1144, 7
    %v1146 = vsub.s32 6, %v1145
    %v1147 = vrot.slane %v1077, %v1146
    %v1148 = vlaneseq
    %v1149 = vshrl.u32 %v1148, 7
    %v1150 = vsub.s32 7, %v1149
    %v1151 = vrot.slane %v1077, %v1150
    %1160 = vmatprep.subr.mxu0 %v54
    %1161 = vmatpush1.msra.mxu0 %v53
    %1162 = vmatprep.subr.mxu0 %v62
    %1163 = vmatpush1.msra.mxu0 %v61
    %1164 = vmatprep.subr.mxu0 %v70
    %1165 = vmatpush1.msra.mxu0 %v69
    %1166 = vmatprep.subr.mxu0 %v78
    %1167 = vmatpush1.msra.mxu0 %v77
    %1168 = vmatprep.subr.mxu0 %v86
    %1169 = vmatpush1.msra.mxu0 %v85
    %1170 = vmatprep.subr.mxu0 %v94
    %1171 = vmatpush1.msra.mxu0 %v93
    %1172 = vmatprep.subr.mxu0 %v102
    %1173 = vmatpush1.msra.mxu0 %v101
    %1174 = vmatprep.subr.mxu0 %v110
    %1175 = vmatpush1.msra.mxu0 %v109
    %1176 = vmatprep.subr.mxu0 %v118
    %1177 = vmatpush1.msra.mxu0 %v117
    %1178 = vmatprep.subr.mxu0 %v126
    %1179 = vmatpush1.msra.mxu0 %v125
    %1180 = vmatprep.subr.mxu0 %v134
    %1181 = vmatpush1.msra.mxu0 %v133
    %1182 = vmatprep.subr.mxu0 %v142
    %1183 = vmatpush1.msra.mxu0 %v141
    %1184 = vmatprep.subr.mxu0 %v150
    %1185 = vmatpush1.msra.mxu0 %v149
    %1186 = vmatprep.subr.mxu0 %v158
    %1187 = vmatpush1.msra.mxu0 %v157
    %1188 = vmatprep.subr.mxu0 %v166
    %1189 = vmatpush1.msra.mxu0 %v165
    %1190 = vmatprep.subr.mxu0 %v174
    %1191 = vmatpush1.msra.mxu0 %v173
    %1192 = vmatprep.subr.mxu0 %v182
    %1193 = vmatpush1.msra.mxu0 %v181
    %1194 = vmatprep.subr.mxu0 %v190
    %1195 = vmatpush1.msra.mxu0 %v189
    %1196 = vmatprep.subr.mxu0 %v198
    %1197 = vmatpush1.msra.mxu0 %v197
    %1198 = vmatprep.subr.mxu0 %v206
    %1199 = vmatpush1.msra.mxu0 %v205
    %1200 = vmatprep.subr.mxu0 %v214
    %1201 = vmatpush1.msra.mxu0 %v213
    %1202 = vmatprep.subr.mxu0 %v222
    %1203 = vmatpush1.msra.mxu0 %v221
    %1204 = vmatprep.subr.mxu0 %v230
    %1205 = vmatpush1.msra.mxu0 %v229
    %1206 = vmatprep.subr.mxu0 %v238
    %1207 = vmatpush1.msra.mxu0 %v237
    %1208 = vmatprep.subr.mxu0 %v246
    %1209 = vmatpush1.msra.mxu0 %v245
    %1210 = vmatprep.subr.mxu0 %v254
    %1211 = vmatpush1.msra.mxu0 %v253
    %1212 = vmatprep.subr.mxu0 %v262
    %1213 = vmatpush1.msra.mxu0 %v261
    %1214 = vmatprep.subr.mxu0 %v270
    %1215 = vmatpush1.msra.mxu0 %v269
    %1216 = vmatprep.subr.mxu0 %v278
    %1217 = vmatpush1.msra.mxu0 %v277
    %1218 = vmatprep.subr.mxu0 %v286
    %1219 = vmatpush1.msra.mxu0 %v285
    %1220 = vmatprep.subr.mxu0 %v294
    %1221 = vmatpush1.msra.mxu0 %v293
    %1222 = vmatprep.subr.mxu0 %v302
    %1223 = vmatpush1.msra.mxu0 %v301
    %1224 = vmatprep.mubr.f32.mxu0 %v1086
    %1225 = vmatmul.mubr.f32.gmra.mrb[0].mxu0 %v1082
    %v1226 = vpop.f32.mrb[0].mxu0
    %v1227 = vadd.f32 %v1123, %v1226
    %v1228 = vpop.f32.mrb[0].mxu0
    %v1229 = vadd.f32 %v1127, %v1228
    %1230 = vdwg.mxu0
    %1231 = vmatprep.subr.mxu0 %v310
    %1232 = vmatpush1.msra.mxu0 %v309
    %1233 = vmatprep.subr.mxu0 %v318
    %1234 = vmatpush1.msra.mxu0 %v317
    %1235 = vmatprep.subr.mxu0 %v326
    %1236 = vmatpush1.msra.mxu0 %v325
    %1237 = vmatprep.subr.mxu0 %v334
    %1238 = vmatpush1.msra.mxu0 %v333
    %1239 = vmatprep.subr.mxu0 %v342
    %1240 = vmatpush1.msra.mxu0 %v341
    %1241 = vmatprep.subr.mxu0 %v350
    %1242 = vmatpush1.msra.mxu0 %v349
    %1243 = vmatprep.subr.mxu0 %v358
    %1244 = vmatpush1.msra.mxu0 %v357
    %1245 = vmatprep.subr.mxu0 %v366
    %1246 = vmatpush1.msra.mxu0 %v365
    %1247 = vmatprep.subr.mxu0 %v374
    %1248 = vmatpush1.msra.mxu0 %v373
    %1249 = vmatprep.subr.mxu0 %v382
    %1250 = vmatpush1.msra.mxu0 %v381
    %1251 = vmatprep.subr.mxu0 %v390
    %1252 = vmatpush1.msra.mxu0 %v389
    %1253 = vmatprep.subr.mxu0 %v398
    %1254 = vmatpush1.msra.mxu0 %v397
    %1255 = vmatprep.subr.mxu0 %v406
    %1256 = vmatpush1.msra.mxu0 %v405
    %1257 = vmatprep.subr.mxu0 %v414
    %1258 = vmatpush1.msra.mxu0 %v413
    %1259 = vmatprep.subr.mxu0 %v422
    %1260 = vmatpush1.msra.mxu0 %v421
    %1261 = vmatprep.subr.mxu0 %v430
    %1262 = vmatpush1.msra.mxu0 %v429
    %1263 = vmatprep.subr.mxu0 %v438
    %1264 = vmatpush1.msra.mxu0 %v437
    %1265 = vmatprep.subr.mxu0 %v446
    %1266 = vmatpush1.msra.mxu0 %v445
    %1267 = vmatprep.subr.mxu0 %v454
    %1268 = vmatpush1.msra.mxu0 %v453
    %1269 = vmatprep.subr.mxu0 %v462
    %1270 = vmatpush1.msra.mxu0 %v461
    %1271 = vmatprep.subr.mxu0 %v470
    %1272 = vmatpush1.msra.mxu0 %v469
    %1273 = vmatprep.subr.mxu0 %v478
    %1274 = vmatpush1.msra.mxu0 %v477
    %1275 = vmatprep.subr.mxu0 %v486
    %1276 = vmatpush1.msra.mxu0 %v485
    %1277 = vmatprep.subr.mxu0 %v494
    %1278 = vmatpush1.msra.mxu0 %v493
    %1279 = vmatprep.subr.mxu0 %v502
    %1280 = vmatpush1.msra.mxu0 %v501
    %1281 = vmatprep.subr.mxu0 %v510
    %1282 = vmatpush1.msra.mxu0 %v509
    %1283 = vmatprep.subr.mxu0 %v518
    %1284 = vmatpush1.msra.mxu0 %v517
    %1285 = vmatprep.subr.mxu0 %v526
    %1286 = vmatpush1.msra.mxu0 %v525
    %1287 = vmatprep.subr.mxu0 %v534
    %1288 = vmatpush1.msra.mxu0 %v533
    %1289 = vmatprep.subr.mxu0 %v542
    %1290 = vmatpush1.msra.mxu0 %v541
    %1291 = vmatprep.subr.mxu0 %v550
    %1292 = vmatpush1.msra.mxu0 %v549
    %1293 = vmatprep.subr.mxu0 %v558
    %1294 = vmatpush1.msra.mxu0 %v557
    %1295 = vmatprep.mubr.f32.mxu0 %v1094
    %1296 = vmatmul.mubr.f32.gmra.mrb[0].mxu0 %v1090
    %v1297 = vpop.f32.mrb[0].mxu0
    %v1298 = vadd.f32 %v1227, %v1297
    %v1299 = vpop.f32.mrb[0].mxu0
    %v1300 = vadd.f32 %v1229, %v1299
    %1301 = vdwg.mxu0
    %1302 = vmatprep.subr.mxu0 %v566
    %1303 = vmatpush1.msra.mxu0 %v565
    %1304 = vmatprep.subr.mxu0 %v574
    %1305 = vmatpush1.msra.mxu0 %v573
    %1306 = vmatprep.subr.mxu0 %v582
    %1307 = vmatpush1.msra.mxu0 %v581
    %1308 = vmatprep.subr.mxu0 %v590
    %1309 = vmatpush1.msra.mxu0 %v589
    %1310 = vmatprep.subr.mxu0 %v598
    %1311 = vmatpush1.msra.mxu0 %v597
    %1312 = vmatprep.subr.mxu0 %v606
    %1313 = vmatpush1.msra.mxu0 %v605
    %1314 = vmatprep.subr.mxu0 %v614
    %1315 = vmatpush1.msra.mxu0 %v613
    %1316 = vmatprep.subr.mxu0 %v622
    %1317 = vmatpush1.msra.mxu0 %v621
    %1318 = vmatprep.subr.mxu0 %v630
    %1319 = vmatpush1.msra.mxu0 %v629
    %1320 = vmatprep.subr.mxu0 %v638
    %1321 = vmatpush1.msra.mxu0 %v637
    %1322 = vmatprep.subr.mxu0 %v646
    %1323 = vmatpush1.msra.mxu0 %v645
    %1324 = vmatprep.subr.mxu0 %v654
    %1325 = vmatpush1.msra.mxu0 %v653
    %1326 = vmatprep.subr.mxu0 %v662
    %1327 = vmatpush1.msra.mxu0 %v661
    %1328 = vmatprep.subr.mxu0 %v670
    %1329 = vmatpush1.msra.mxu0 %v669
    %1330 = vmatprep.subr.mxu0 %v678
    %1331 = vmatpush1.msra.mxu0 %v677
    %1332 = vmatprep.subr.mxu0 %v686
    %1333 = vmatpush1.msra.mxu0 %v685
    %1334 = vmatprep.subr.mxu0 %v694
    %1335 = vmatpush1.msra.mxu0 %v693
    %1336 = vmatprep.subr.mxu0 %v702
    %1337 = vmatpush1.msra.mxu0 %v701
    %1338 = vmatprep.subr.mxu0 %v710
    %1339 = vmatpush1.msra.mxu0 %v709
    %1340 = vmatprep.subr.mxu0 %v718
    %1341 = vmatpush1.msra.mxu0 %v717
    %1342 = vmatprep.subr.mxu0 %v726
    %1343 = vmatpush1.msra.mxu0 %v725
    %1344 = vmatprep.subr.mxu0 %v734
    %1345 = vmatpush1.msra.mxu0 %v733
    %1346 = vmatprep.subr.mxu0 %v742
    %1347 = vmatpush1.msra.mxu0 %v741
    %1348 = vmatprep.subr.mxu0 %v750
    %1349 = vmatpush1.msra.mxu0 %v749
    %1350 = vmatprep.subr.mxu0 %v758
    %1351 = vmatpush1.msra.mxu0 %v757
    %1352 = vmatprep.subr.mxu0 %v766
    %1353 = vmatpush1.msra.mxu0 %v765
    %1354 = vmatprep.subr.mxu0 %v774
    %1355 = vmatpush1.msra.mxu0 %v773
    %1356 = vmatprep.subr.mxu0 %v782
    %1357 = vmatpush1.msra.mxu0 %v781
    %1358 = vmatprep.subr.mxu0 %v790
    %1359 = vmatpush1.msra.mxu0 %v789
    %1360 = vmatprep.subr.mxu0 %v798
    %1361 = vmatpush1.msra.mxu0 %v797
    %1362 = vmatprep.subr.mxu0 %v806
    %1363 = vmatpush1.msra.mxu0 %v805
    %1364 = vmatprep.subr.mxu0 %v814
    %1365 = vmatpush1.msra.mxu0 %v813
    %1366 = vmatprep.mubr.f32.mxu0 %v1102
    %1367 = vmatmul.mubr.f32.gmra.mrb[0].mxu0 %v1098
    %v1368 = vpop.f32.mrb[0].mxu0
    %v1369 = vadd.f32 %v1298, %v1368
    %v1370 = vpop.f32.mrb[0].mxu0
    %v1371 = vadd.f32 %v1300, %v1370
    %1372 = vdwg.mxu0
    %1373 = vmatprep.subr.mxu0 %v822
    %1374 = vmatpush1.msra.mxu0 %v821
    %1375 = vmatprep.subr.mxu0 %v830
    %1376 = vmatpush1.msra.mxu0 %v829
    %1377 = vmatprep.subr.mxu0 %v838
    %1378 = vmatpush1.msra.mxu0 %v837
    %1379 = vmatprep.subr.mxu0 %v846
    %1380 = vmatpush1.msra.mxu0 %v845
    %1381 = vmatprep.subr.mxu0 %v854
    %1382 = vmatpush1.msra.mxu0 %v853
    %1383 = vmatprep.subr.mxu0 %v862
    %1384 = vmatpush1.msra.mxu0 %v861
    %1385 = vmatprep.subr.mxu0 %v870
    %1386 = vmatpush1.msra.mxu0 %v869
    %1387 = vmatprep.subr.mxu0 %v878
    %1388 = vmatpush1.msra.mxu0 %v877
    %1389 = vmatprep.subr.mxu0 %v886
    %1390 = vmatpush1.msra.mxu0 %v885
    %1391 = vmatprep.subr.mxu0 %v894
    %1392 = vmatpush1.msra.mxu0 %v893
    %1393 = vmatprep.subr.mxu0 %v902
    %1394 = vmatpush1.msra.mxu0 %v901
    %1395 = vmatprep.subr.mxu0 %v910
    %1396 = vmatpush1.msra.mxu0 %v909
    %1397 = vmatprep.subr.mxu0 %v918
    %1398 = vmatpush1.msra.mxu0 %v917
    %1399 = vmatprep.subr.mxu0 %v926
    %1400 = vmatpush1.msra.mxu0 %v925
    %1401 = vmatprep.subr.mxu0 %v934
    %1402 = vmatpush1.msra.mxu0 %v933
    %1403 = vmatprep.subr.mxu0 %v942
    %1404 = vmatpush1.msra.mxu0 %v941
    %1405 = vmatprep.subr.mxu0 %v950
    %1406 = vmatpush1.msra.mxu0 %v949
    %1407 = vmatprep.subr.mxu0 %v958
    %1408 = vmatpush1.msra.mxu0 %v957
    %1409 = vmatprep.subr.mxu0 %v966
    %1410 = vmatpush1.msra.mxu0 %v965
    %1411 = vmatprep.subr.mxu0 %v974
    %1412 = vmatpush1.msra.mxu0 %v973
    %1413 = vmatprep.subr.mxu0 %v982
    %1414 = vmatpush1.msra.mxu0 %v981
    %1415 = vmatprep.subr.mxu0 %v990
    %1416 = vmatpush1.msra.mxu0 %v989
    %1417 = vmatprep.subr.mxu0 %v998
    %1418 = vmatpush1.msra.mxu0 %v997
    %1419 = vmatprep.subr.mxu0 %v1006
    %1420 = vmatpush1.msra.mxu0 %v1005
    %1421 = vmatprep.subr.mxu0 %v1014
    %1422 = vmatpush1.msra.mxu0 %v1013
    %1423 = vmatprep.subr.mxu0 %v1022
    %1424 = vmatpush1.msra.mxu0 %v1021
    %1425 = vmatprep.subr.mxu0 %v1030
    %1426 = vmatpush1.msra.mxu0 %v1029
    %1427 = vmatprep.subr.mxu0 %v1038
    %1428 = vmatpush1.msra.mxu0 %v1037
    %1429 = vmatprep.subr.mxu0 %v1046
    %1430 = vmatpush1.msra.mxu0 %v1045
    %1431 = vmatprep.subr.mxu0 %v1054
    %1432 = vmatpush1.msra.mxu0 %v1053
    %1433 = vmatprep.subr.mxu0 %v1062
    %1434 = vmatpush1.msra.mxu0 %v1061
    %1435 = vmatprep.subr.mxu0 %v1070
    %1436 = vmatpush1.msra.mxu0 %v1069
    %1437 = vmatprep.mubr.f32.mxu0 %v1110
    %1438 = vmatmul.mubr.f32.gmra.mrb[0].mxu0 %v1106
    %v1439 = vpop.f32.mrb[0].mxu0
    %v1440 = vadd.f32 %v1369, %v1439
    %v1441 = vpop.f32.mrb[0].mxu0
    %v1442 = vadd.f32 %v1371, %v1441
    %1443 = vdwg.mxu0
    %1444 = vmatprep.subr.mxu0 %v56
    %1445 = vmatpush1.msra.mxu0 %v55
    %1446 = vmatprep.subr.mxu0 %v64
    %1447 = vmatpush1.msra.mxu0 %v63
    %1448 = vmatprep.subr.mxu0 %v72
    %1449 = vmatpush1.msra.mxu0 %v71
    %1450 = vmatprep.subr.mxu0 %v80
    %1451 = vmatpush1.msra.mxu0 %v79
    %1452 = vmatprep.subr.mxu0 %v88
    %1453 = vmatpush1.msra.mxu0 %v87
    %1454 = vmatprep.subr.mxu0 %v96
    %1455 = vmatpush1.msra.mxu0 %v95
    %1456 = vmatprep.subr.mxu0 %v104
    %1457 = vmatpush1.msra.mxu0 %v103
    %1458 = vmatprep.subr.mxu0 %v112
    %1459 = vmatpush1.msra.mxu0 %v111
    %1460 = vmatprep.subr.mxu0 %v120
    %1461 = vmatpush1.msra.mxu0 %v119
    %1462 = vmatprep.subr.mxu0 %v128
    %1463 = vmatpush1.msra.mxu0 %v127
    %1464 = vmatprep.subr.mxu0 %v136
    %1465 = vmatpush1.msra.mxu0 %v135
    %1466 = vmatprep.subr.mxu0 %v144
    %1467 = vmatpush1.msra.mxu0 %v143
    %1468 = vmatprep.subr.mxu0 %v152
    %1469 = vmatpush1.msra.mxu0 %v151
    %1470 = vmatprep.subr.mxu0 %v160
    %1471 = vmatpush1.msra.mxu0 %v159
    %1472 = vmatprep.subr.mxu0 %v168
    %1473 = vmatpush1.msra.mxu0 %v167
    %1474 = vmatprep.subr.mxu0 %v176
    %1475 = vmatpush1.msra.mxu0 %v175
    %1476 = vmatprep.subr.mxu0 %v184
    %1477 = vmatpush1.msra.mxu0 %v183
    %1478 = vmatprep.subr.mxu0 %v192
    %1479 = vmatpush1.msra.mxu0 %v191
    %1480 = vmatprep.subr.mxu0 %v200
    %1481 = vmatpush1.msra.mxu0 %v199
    %1482 = vmatprep.subr.mxu0 %v208
    %1483 = vmatpush1.msra.mxu0 %v207
    %1484 = vmatprep.subr.mxu0 %v216
    %1485 = vmatpush1.msra.mxu0 %v215
    %1486 = vmatprep.subr.mxu0 %v224
    %1487 = vmatpush1.msra.mxu0 %v223
    %1488 = vmatprep.subr.mxu0 %v232
    %1489 = vmatpush1.msra.mxu0 %v231
    %1490 = vmatprep.subr.mxu0 %v240
    %1491 = vmatpush1.msra.mxu0 %v239
    %1492 = vmatprep.subr.mxu0 %v248
    %1493 = vmatpush1.msra.mxu0 %v247
    %1494 = vmatprep.subr.mxu0 %v256
    %1495 = vmatpush1.msra.mxu0 %v255
    %1496 = vmatprep.subr.mxu0 %v264
    %1497 = vmatpush1.msra.mxu0 %v263
    %1498 = vmatprep.subr.mxu0 %v272
    %1499 = vmatpush1.msra.mxu0 %v271
    %1500 = vmatprep.subr.mxu0 %v280
    %1501 = vmatpush1.msra.mxu0 %v279
    %1502 = vmatprep.subr.mxu0 %v288
    %1503 = vmatpush1.msra.mxu0 %v287
    %1504 = vmatprep.subr.mxu0 %v296
    %1505 = vmatpush1.msra.mxu0 %v295
    %1506 = vmatprep.subr.mxu0 %v304
    %1507 = vmatpush1.msra.mxu0 %v303
    %1508 = vmatprep.mubr.f32.mxu0 %v1086
    %1509 = vmatmul.mubr.f32.gmra.mrb[0].mxu0 %v1082
    %v1510 = vpop.f32.mrb[0].mxu0
    %v1511 = vadd.f32 %v1131, %v1510
    %v1512 = vpop.f32.mrb[0].mxu0
    %v1513 = vadd.f32 %v1135, %v1512
    %1514 = vdwg.mxu0
    %1515 = vmatprep.subr.mxu0 %v312
    %1516 = vmatpush1.msra.mxu0 %v311
    %1517 = vmatprep.subr.mxu0 %v320
    %1518 = vmatpush1.msra.mxu0 %v319
    %1519 = vmatprep.subr.mxu0 %v328
    %1520 = vmatpush1.msra.mxu0 %v327
    %1521 = vmatprep.subr.mxu0 %v336
    %1522 = vmatpush1.msra.mxu0 %v335
    %1523 = vmatprep.subr.mxu0 %v344
    %1524 = vmatpush1.msra.mxu0 %v343
    %1525 = vmatprep.subr.mxu0 %v352
    %1526 = vmatpush1.msra.mxu0 %v351
    %1527 = vmatprep.subr.mxu0 %v360
    %1528 = vmatpush1.msra.mxu0 %v359
    %1529 = vmatprep.subr.mxu0 %v368
    %1530 = vmatpush1.msra.mxu0 %v367
    %1531 = vmatprep.subr.mxu0 %v376
    %1532 = vmatpush1.msra.mxu0 %v375
    %1533 = vmatprep.subr.mxu0 %v384
    %1534 = vmatpush1.msra.mxu0 %v383
    %1535 = vmatprep.subr.mxu0 %v392
    %1536 = vmatpush1.msra.mxu0 %v391
    %1537 = vmatprep.subr.mxu0 %v400
    %1538 = vmatpush1.msra.mxu0 %v399
    %1539 = vmatprep.subr.mxu0 %v408
    %1540 = vmatpush1.msra.mxu0 %v407
    %1541 = vmatprep.subr.mxu0 %v416
    %1542 = vmatpush1.msra.mxu0 %v415
    %1543 = vmatprep.subr.mxu0 %v424
    %1544 = vmatpush1.msra.mxu0 %v423
    %1545 = vmatprep.subr.mxu0 %v432
    %1546 = vmatpush1.msra.mxu0 %v431
    %1547 = vmatprep.subr.mxu0 %v440
    %1548 = vmatpush1.msra.mxu0 %v439
    %1549 = vmatprep.subr.mxu0 %v448
    %1550 = vmatpush1.msra.mxu0 %v447
    %1551 = vmatprep.subr.mxu0 %v456
    %1552 = vmatpush1.msra.mxu0 %v455
    %1553 = vmatprep.subr.mxu0 %v464
    %1554 = vmatpush1.msra.mxu0 %v463
    %1555 = vmatprep.subr.mxu0 %v472
    %1556 = vmatpush1.msra.mxu0 %v471
    %1557 = vmatprep.subr.mxu0 %v480
    %1558 = vmatpush1.msra.mxu0 %v479
    %1559 = vmatprep.subr.mxu0 %v488
    %1560 = vmatpush1.msra.mxu0 %v487
    %1561 = vmatprep.subr.mxu0 %v496
    %1562 = vmatpush1.msra.mxu0 %v495
    %1563 = vmatprep.subr.mxu0 %v504
    %1564 = vmatpush1.msra.mxu0 %v503
    %1565 = vmatprep.subr.mxu0 %v512
    %1566 = vmatpush1.msra.mxu0 %v511
    %1567 = vmatprep.subr.mxu0 %v520
    %1568 = vmatpush1.msra.mxu0 %v519
    %1569 = vmatprep.subr.mxu0 %v528
    %1570 = vmatpush1.msra.mxu0 %v527
    %1571 = vmatprep.subr.mxu0 %v536
    %1572 = vmatpush1.msra.mxu0 %v535
    %1573 = vmatprep.subr.mxu0 %v544
    %1574 = vmatpush1.msra.mxu0 %v543
    %1575 = vmatprep.subr.mxu0 %v552
    %1576 = vmatpush1.msra.mxu0 %v551
    %1577 = vmatprep.subr.mxu0 %v560
    %1578 = vmatpush1.msra.mxu0 %v559
    %1579 = vmatprep.mubr.f32.mxu0 %v1094
    %1580 = vmatmul.mubr.f32.gmra.mrb[0].mxu0 %v1090
    %v1581 = vpop.f32.mrb[0].mxu0
    %v1582 = vadd.f32 %v1511, %v1581
    %v1583 = vpop.f32.mrb[0].mxu0
    %v1584 = vadd.f32 %v1513, %v1583
    %1585 = vdwg.mxu0
    %1586 = vmatprep.subr.mxu0 %v568
    %1587 = vmatpush1.msra.mxu0 %v567
    %1588 = vmatprep.subr.mxu0 %v576
    %1589 = vmatpush1.msra.mxu0 %v575
    %1590 = vmatprep.subr.mxu0 %v584
    %1591 = vmatpush1.msra.mxu0 %v583
    %1592 = vmatprep.subr.mxu0 %v592
    %1593 = vmatpush1.msra.mxu0 %v591
    %1594 = vmatprep.subr.mxu0 %v600
    %1595 = vmatpush1.msra.mxu0 %v599
    %1596 = vmatprep.subr.mxu0 %v608
    %1597 = vmatpush1.msra.mxu0 %v607
    %1598 = vmatprep.subr.mxu0 %v616
    %1599 = vmatpush1.msra.mxu0 %v615
    %1600 = vmatprep.subr.mxu0 %v624
    %1601 = vmatpush1.msra.mxu0 %v623
    %1602 = vmatprep.subr.mxu0 %v632
    %1603 = vmatpush1.msra.mxu0 %v631
    %1604 = vmatprep.subr.mxu0 %v640
    %1605 = vmatpush1.msra.mxu0 %v639
    %1606 = vmatprep.subr.mxu0 %v648
    %1607 = vmatpush1.msra.mxu0 %v647
    %1608 = vmatprep.subr.mxu0 %v656
    %1609 = vmatpush1.msra.mxu0 %v655
    %1610 = vmatprep.subr.mxu0 %v664
    %1611 = vmatpush1.msra.mxu0 %v663
    %1612 = vmatprep.subr.mxu0 %v672
    %1613 = vmatpush1.msra.mxu0 %v671
    %1614 = vmatprep.subr.mxu0 %v680
    %1615 = vmatpush1.msra.mxu0 %v679
    %1616 = vmatprep.subr.mxu0 %v688
    %1617 = vmatpush1.msra.mxu0 %v687
    %1618 = vmatprep.subr.mxu0 %v696
    %1619 = vmatpush1.msra.mxu0 %v695
    %1620 = vmatprep.subr.mxu0 %v704
    %1621 = vmatpush1.msra.mxu0 %v703
    %1622 = vmatprep.subr.mxu0 %v712
    %1623 = vmatpush1.msra.mxu0 %v711
    %1624 = vmatprep.subr.mxu0 %v720
    %1625 = vmatpush1.msra.mxu0 %v719
    %1626 = vmatprep.subr.mxu0 %v728
    %1627 = vmatpush1.msra.mxu0 %v727
    %1628 = vmatprep.subr.mxu0 %v736
    %1629 = vmatpush1.msra.mxu0 %v735
    %1630 = vmatprep.subr.mxu0 %v744
    %1631 = vmatpush1.msra.mxu0 %v743
    %1632 = vmatprep.subr.mxu0 %v752
    %1633 = vmatpush1.msra.mxu0 %v751
    %1634 = vmatprep.subr.mxu0 %v760
    %1635 = vmatpush1.msra.mxu0 %v759
    %1636 = vmatprep.subr.mxu0 %v768
    %1637 = vmatpush1.msra.mxu0 %v767
    %1638 = vmatprep.subr.mxu0 %v776
    %1639 = vmatpush1.msra.mxu0 %v775
    %1640 = vmatprep.subr.mxu0 %v784
    %1641 = vmatpush1.msra.mxu0 %v783
    %1642 = vmatprep.subr.mxu0 %v792
    %1643 = vmatpush1.msra.mxu0 %v791
    %1644 = vmatprep.subr.mxu0 %v800
    %1645 = vmatpush1.msra.mxu0 %v799
    %1646 = vmatprep.subr.mxu0 %v808
    %1647 = vmatpush1.msra.mxu0 %v807
    %1648 = vmatprep.subr.mxu0 %v816
    %1649 = vmatpush1.msra.mxu0 %v815
    %1650 = vmatprep.mubr.f32.mxu0 %v1102
    %1651 = vmatmul.mubr.f32.gmra.mrb[0].mxu0 %v1098
    %v1652 = vpop.f32.mrb[0].mxu0
    %v1653 = vadd.f32 %v1582, %v1652
    %v1654 = vpop.f32.mrb[0].mxu0
    %v1655 = vadd.f32 %v1584, %v1654
    %1656 = vdwg.mxu0
    %1657 = vmatprep.subr.mxu0 %v824
    %1658 = vmatpush1.msra.mxu0 %v823
    %1659 = vmatprep.subr.mxu0 %v832
    %1660 = vmatpush1.msra.mxu0 %v831
    %1661 = vmatprep.subr.mxu0 %v840
    %1662 = vmatpush1.msra.mxu0 %v839
    %1663 = vmatprep.subr.mxu0 %v848
    %1664 = vmatpush1.msra.mxu0 %v847
    %1665 = vmatprep.subr.mxu0 %v856
    %1666 = vmatpush1.msra.mxu0 %v855
    %1667 = vmatprep.subr.mxu0 %v864
    %1668 = vmatpush1.msra.mxu0 %v863
    %1669 = vmatprep.subr.mxu0 %v872
    %1670 = vmatpush1.msra.mxu0 %v871
    %1671 = vmatprep.subr.mxu0 %v880
    %1672 = vmatpush1.msra.mxu0 %v879
    %1673 = vmatprep.subr.mxu0 %v888
    %1674 = vmatpush1.msra.mxu0 %v887
    %1675 = vmatprep.subr.mxu0 %v896
    %1676 = vmatpush1.msra.mxu0 %v895
    %1677 = vmatprep.subr.mxu0 %v904
    %1678 = vmatpush1.msra.mxu0 %v903
    %1679 = vmatprep.subr.mxu0 %v912
    %1680 = vmatpush1.msra.mxu0 %v911
    %1681 = vmatprep.subr.mxu0 %v920
    %1682 = vmatpush1.msra.mxu0 %v919
    %1683 = vmatprep.subr.mxu0 %v928
    %1684 = vmatpush1.msra.mxu0 %v927
    %1685 = vmatprep.subr.mxu0 %v936
    %1686 = vmatpush1.msra.mxu0 %v935
    %1687 = vmatprep.subr.mxu0 %v944
    %1688 = vmatpush1.msra.mxu0 %v943
    %1689 = vmatprep.subr.mxu0 %v952
    %1690 = vmatpush1.msra.mxu0 %v951
    %1691 = vmatprep.subr.mxu0 %v960
    %1692 = vmatpush1.msra.mxu0 %v959
    %1693 = vmatprep.subr.mxu0 %v968
    %1694 = vmatpush1.msra.mxu0 %v967
    %1695 = vmatprep.subr.mxu0 %v976
    %1696 = vmatpush1.msra.mxu0 %v975
    %1697 = vmatprep.subr.mxu0 %v984
    %1698 = vmatpush1.msra.mxu0 %v983
    %1699 = vmatprep.subr.mxu0 %v992
    %1700 = vmatpush1.msra.mxu0 %v991
    %1701 = vmatprep.subr.mxu0 %v1000
    %1702 = vmatpush1.msra.mxu0 %v999
    %1703 = vmatprep.subr.mxu0 %v1008
    %1704 = vmatpush1.msra.mxu0 %v1007
    %1705 = vmatprep.subr.mxu0 %v1016
    %1706 = vmatpush1.msra.mxu0 %v1015
    %1707 = vmatprep.subr.mxu0 %v1024
    %1708 = vmatpush1.msra.mxu0 %v1023
    %1709 = vmatprep.subr.mxu0 %v1032
    %1710 = vmatpush1.msra.mxu0 %v1031
    %1711 = vmatprep.subr.mxu0 %v1040
    %1712 = vmatpush1.msra.mxu0 %v1039
    %1713 = vmatprep.subr.mxu0 %v1048
    %1714 = vmatpush1.msra.mxu0 %v1047
    %1715 = vmatprep.subr.mxu0 %v1056
    %1716 = vmatpush1.msra.mxu0 %v1055
    %1717 = vmatprep.subr.mxu0 %v1064
    %1718 = vmatpush1.msra.mxu0 %v1063
    %1719 = vmatprep.subr.mxu0 %v1072
    %1720 = vmatpush1.msra.mxu0 %v1071
    %1721 = vmatprep.mubr.f32.mxu0 %v1110
    %1722 = vmatmul.mubr.f32.gmra.mrb[0].mxu0 %v1106
    %v1723 = vpop.f32.mrb[0].mxu0
    %v1724 = vadd.f32 %v1653, %v1723
    %v1725 = vpop.f32.mrb[0].mxu0
    %v1726 = vadd.f32 %v1655, %v1725
    %1727 = vdwg.mxu0
    %1728 = vmatprep.subr.mxu0 %v58
    %1729 = vmatpush1.msra.mxu0 %v57
    %1730 = vmatprep.subr.mxu0 %v66
    %1731 = vmatpush1.msra.mxu0 %v65
    %1732 = vmatprep.subr.mxu0 %v74
    %1733 = vmatpush1.msra.mxu0 %v73
    %1734 = vmatprep.subr.mxu0 %v82
    %1735 = vmatpush1.msra.mxu0 %v81
    %1736 = vmatprep.subr.mxu0 %v90
    %1737 = vmatpush1.msra.mxu0 %v89
    %1738 = vmatprep.subr.mxu0 %v98
    %1739 = vmatpush1.msra.mxu0 %v97
    %1740 = vmatprep.subr.mxu0 %v106
    %1741 = vmatpush1.msra.mxu0 %v105
    %1742 = vmatprep.subr.mxu0 %v114
    %1743 = vmatpush1.msra.mxu0 %v113
    %1744 = vmatprep.subr.mxu0 %v122
    %1745 = vmatpush1.msra.mxu0 %v121
    %1746 = vmatprep.subr.mxu0 %v130
    %1747 = vmatpush1.msra.mxu0 %v129
    %1748 = vmatprep.subr.mxu0 %v138
    %1749 = vmatpush1.msra.mxu0 %v137
    %1750 = vmatprep.subr.mxu0 %v146
    %1751 = vmatpush1.msra.mxu0 %v145
    %1752 = vmatprep.subr.mxu0 %v154
    %1753 = vmatpush1.msra.mxu0 %v153
    %1754 = vmatprep.subr.mxu0 %v162
    %1755 = vmatpush1.msra.mxu0 %v161
    %1756 = vmatprep.subr.mxu0 %v170
    %1757 = vmatpush1.msra.mxu0 %v169
    %1758 = vmatprep.subr.mxu0 %v178
    %1759 = vmatpush1.msra.mxu0 %v177
    %1760 = vmatprep.subr.mxu0 %v186
    %1761 = vmatpush1.msra.mxu0 %v185
    %1762 = vmatprep.subr.mxu0 %v194
    %1763 = vmatpush1.msra.mxu0 %v193
    %1764 = vmatprep.subr.mxu0 %v202
    %1765 = vmatpush1.msra.mxu0 %v201
    %1766 = vmatprep.subr.mxu0 %v210
    %1767 = vmatpush1.msra.mxu0 %v209
    %1768 = vmatprep.subr.mxu0 %v218
    %1769 = vmatpush1.msra.mxu0 %v217
    %1770 = vmatprep.subr.mxu0 %v226
    %1771 = vmatpush1.msra.mxu0 %v225
    %1772 = vmatprep.subr.mxu0 %v234
    %1773 = vmatpush1.msra.mxu0 %v233
    %1774 = vmatprep.subr.mxu0 %v242
    %1775 = vmatpush1.msra.mxu0 %v241
    %1776 = vmatprep.subr.mxu0 %v250
    %1777 = vmatpush1.msra.mxu0 %v249
    %1778 = vmatprep.subr.mxu0 %v258
    %1779 = vmatpush1.msra.mxu0 %v257
    %1780 = vmatprep.subr.mxu0 %v266
    %1781 = vmatpush1.msra.mxu0 %v265
    %1782 = vmatprep.subr.mxu0 %v274
    %1783 = vmatpush1.msra.mxu0 %v273
    %1784 = vmatprep.subr.mxu0 %v282
    %1785 = vmatpush1.msra.mxu0 %v281
    %1786 = vmatprep.subr.mxu0 %v290
    %1787 = vmatpush1.msra.mxu0 %v289
    %1788 = vmatprep.subr.mxu0 %v298
    %1789 = vmatpush1.msra.mxu0 %v297
    %1790 = vmatprep.subr.mxu0 %v306
    %1791 = vmatpush1.msra.mxu0 %v305
    %1792 = vmatprep.mubr.f32.mxu0 %v1086
    %1793 = vmatmul.mubr.f32.gmra.mrb[0].mxu0 %v1082
    %v1794 = vpop.f32.mrb[0].mxu0
    %v1795 = vadd.f32 %v1139, %v1794
    %v1796 = vpop.f32.mrb[0].mxu0
    %v1797 = vadd.f32 %v1143, %v1796
    %1798 = vdwg.mxu0
    %1799 = vmatprep.subr.mxu0 %v314
    %1800 = vmatpush1.msra.mxu0 %v313
    %1801 = vmatprep.subr.mxu0 %v322
    %1802 = vmatpush1.msra.mxu0 %v321
    %1803 = vmatprep.subr.mxu0 %v330
    %1804 = vmatpush1.msra.mxu0 %v329
    %1805 = vmatprep.subr.mxu0 %v338
    %1806 = vmatpush1.msra.mxu0 %v337
    %1807 = vmatprep.subr.mxu0 %v346
    %1808 = vmatpush1.msra.mxu0 %v345
    %1809 = vmatprep.subr.mxu0 %v354
    %1810 = vmatpush1.msra.mxu0 %v353
    %1811 = vmatprep.subr.mxu0 %v362
    %1812 = vmatpush1.msra.mxu0 %v361
    %1813 = vmatprep.subr.mxu0 %v370
    %1814 = vmatpush1.msra.mxu0 %v369
    %1815 = vmatprep.subr.mxu0 %v378
    %1816 = vmatpush1.msra.mxu0 %v377
    %1817 = vmatprep.subr.mxu0 %v386
    %1818 = vmatpush1.msra.mxu0 %v385
    %1819 = vmatprep.subr.mxu0 %v394
    %1820 = vmatpush1.msra.mxu0 %v393
    %1821 = vmatprep.subr.mxu0 %v402
    %1822 = vmatpush1.msra.mxu0 %v401
    %1823 = vmatprep.subr.mxu0 %v410
    %1824 = vmatpush1.msra.mxu0 %v409
    %1825 = vmatprep.subr.mxu0 %v418
    %1826 = vmatpush1.msra.mxu0 %v417
    %1827 = vmatprep.subr.mxu0 %v426
    %1828 = vmatpush1.msra.mxu0 %v425
    %1829 = vmatprep.subr.mxu0 %v434
    %1830 = vmatpush1.msra.mxu0 %v433
    %1831 = vmatprep.subr.mxu0 %v442
    %1832 = vmatpush1.msra.mxu0 %v441
    %1833 = vmatprep.subr.mxu0 %v450
    %1834 = vmatpush1.msra.mxu0 %v449
    %1835 = vmatprep.subr.mxu0 %v458
    %1836 = vmatpush1.msra.mxu0 %v457
    %1837 = vmatprep.subr.mxu0 %v466
    %1838 = vmatpush1.msra.mxu0 %v465
    %1839 = vmatprep.subr.mxu0 %v474
    %1840 = vmatpush1.msra.mxu0 %v473
    %1841 = vmatprep.subr.mxu0 %v482
    %1842 = vmatpush1.msra.mxu0 %v481
    %1843 = vmatprep.subr.mxu0 %v490
    %1844 = vmatpush1.msra.mxu0 %v489
    %1845 = vmatprep.subr.mxu0 %v498
    %1846 = vmatpush1.msra.mxu0 %v497
    %1847 = vmatprep.subr.mxu0 %v506
    %1848 = vmatpush1.msra.mxu0 %v505
    %1849 = vmatprep.subr.mxu0 %v514
    %1850 = vmatpush1.msra.mxu0 %v513
    %1851 = vmatprep.subr.mxu0 %v522
    %1852 = vmatpush1.msra.mxu0 %v521
    %1853 = vmatprep.subr.mxu0 %v530
    %1854 = vmatpush1.msra.mxu0 %v529
    %1855 = vmatprep.subr.mxu0 %v538
    %1856 = vmatpush1.msra.mxu0 %v537
    %1857 = vmatprep.subr.mxu0 %v546
    %1858 = vmatpush1.msra.mxu0 %v545
    %1859 = vmatprep.subr.mxu0 %v554
    %1860 = vmatpush1.msra.mxu0 %v553
    %1861 = vmatprep.subr.mxu0 %v562
    %1862 = vmatpush1.msra.mxu0 %v561
    %1863 = vmatprep.mubr.f32.mxu0 %v1094
    %1864 = vmatmul.mubr.f32.gmra.mrb[0].mxu0 %v1090
    %v1865 = vpop.f32.mrb[0].mxu0
    %v1866 = vadd.f32 %v1795, %v1865
    %v1867 = vpop.f32.mrb[0].mxu0
    %v1868 = vadd.f32 %v1797, %v1867
    %1869 = vdwg.mxu0
    %1870 = vmatprep.subr.mxu0 %v570
    %1871 = vmatpush1.msra.mxu0 %v569
    %1872 = vmatprep.subr.mxu0 %v578
    %1873 = vmatpush1.msra.mxu0 %v577
    %1874 = vmatprep.subr.mxu0 %v586
    %1875 = vmatpush1.msra.mxu0 %v585
    %1876 = vmatprep.subr.mxu0 %v594
    %1877 = vmatpush1.msra.mxu0 %v593
    %1878 = vmatprep.subr.mxu0 %v602
    %1879 = vmatpush1.msra.mxu0 %v601
    %1880 = vmatprep.subr.mxu0 %v610
    %1881 = vmatpush1.msra.mxu0 %v609
    %1882 = vmatprep.subr.mxu0 %v618
    %1883 = vmatpush1.msra.mxu0 %v617
    %1884 = vmatprep.subr.mxu0 %v626
    %1885 = vmatpush1.msra.mxu0 %v625
    %1886 = vmatprep.subr.mxu0 %v634
    %1887 = vmatpush1.msra.mxu0 %v633
    %1888 = vmatprep.subr.mxu0 %v642
    %1889 = vmatpush1.msra.mxu0 %v641
    %1890 = vmatprep.subr.mxu0 %v650
    %1891 = vmatpush1.msra.mxu0 %v649
    %1892 = vmatprep.subr.mxu0 %v658
    %1893 = vmatpush1.msra.mxu0 %v657
    %1894 = vmatprep.subr.mxu0 %v666
    %1895 = vmatpush1.msra.mxu0 %v665
    %1896 = vmatprep.subr.mxu0 %v674
    %1897 = vmatpush1.msra.mxu0 %v673
    %1898 = vmatprep.subr.mxu0 %v682
    %1899 = vmatpush1.msra.mxu0 %v681
    %1900 = vmatprep.subr.mxu0 %v690
    %1901 = vmatpush1.msra.mxu0 %v689
    %1902 = vmatprep.subr.mxu0 %v698
    %1903 = vmatpush1.msra.mxu0 %v697
    %1904 = vmatprep.subr.mxu0 %v706
    %1905 = vmatpush1.msra.mxu0 %v705
    %1906 = vmatprep.subr.mxu0 %v714
    %1907 = vmatpush1.msra.mxu0 %v713
    %1908 = vmatprep.subr.mxu0 %v722
    %1909 = vmatpush1.msra.mxu0 %v721
    %1910 = vmatprep.subr.mxu0 %v730
    %1911 = vmatpush1.msra.mxu0 %v729
    %1912 = vmatprep.subr.mxu0 %v738
    %1913 = vmatpush1.msra.mxu0 %v737
    %1914 = vmatprep.subr.mxu0 %v746
    %1915 = vmatpush1.msra.mxu0 %v745
    %1916 = vmatprep.subr.mxu0 %v754
    %1917 = vmatpush1.msra.mxu0 %v753
    %1918 = vmatprep.subr.mxu0 %v762
    %1919 = vmatpush1.msra.mxu0 %v761
    %1920 = vmatprep.subr.mxu0 %v770
    %1921 = vmatpush1.msra.mxu0 %v769
    %1922 = vmatprep.subr.mxu0 %v778
    %1923 = vmatpush1.msra.mxu0 %v777
    %1924 = vmatprep.subr.mxu0 %v786
    %1925 = vmatpush1.msra.mxu0 %v785
    %1926 = vmatprep.subr.mxu0 %v794
    %1927 = vmatpush1.msra.mxu0 %v793
    %1928 = vmatprep.subr.mxu0 %v802
    %1929 = vmatpush1.msra.mxu0 %v801
    %1930 = vmatprep.subr.mxu0 %v810
    %1931 = vmatpush1.msra.mxu0 %v809
    %1932 = vmatprep.subr.mxu0 %v818
    %1933 = vmatpush1.msra.mxu0 %v817
    %1934 = vmatprep.mubr.f32.mxu0 %v1102
    %1935 = vmatmul.mubr.f32.gmra.mrb[0].mxu0 %v1098
    %v1936 = vpop.f32.mrb[0].mxu0
    %v1937 = vadd.f32 %v1866, %v1936
    %v1938 = vpop.f32.mrb[0].mxu0
    %v1939 = vadd.f32 %v1868, %v1938
    %1940 = vdwg.mxu0
    %1941 = vmatprep.subr.mxu0 %v826
    %1942 = vmatpush1.msra.mxu0 %v825
    %1943 = vmatprep.subr.mxu0 %v834
    %1944 = vmatpush1.msra.mxu0 %v833
    %1945 = vmatprep.subr.mxu0 %v842
    %1946 = vmatpush1.msra.mxu0 %v841
    %1947 = vmatprep.subr.mxu0 %v850
    %1948 = vmatpush1.msra.mxu0 %v849
    %1949 = vmatprep.subr.mxu0 %v858
    %1950 = vmatpush1.msra.mxu0 %v857
    %1951 = vmatprep.subr.mxu0 %v866
    %1952 = vmatpush1.msra.mxu0 %v865
    %1953 = vmatprep.subr.mxu0 %v874
    %1954 = vmatpush1.msra.mxu0 %v873
    %1955 = vmatprep.subr.mxu0 %v882
    %1956 = vmatpush1.msra.mxu0 %v881
    %1957 = vmatprep.subr.mxu0 %v890
    %1958 = vmatpush1.msra.mxu0 %v889
    %1959 = vmatprep.subr.mxu0 %v898
    %1960 = vmatpush1.msra.mxu0 %v897
    %1961 = vmatprep.subr.mxu0 %v906
    %1962 = vmatpush1.msra.mxu0 %v905
    %1963 = vmatprep.subr.mxu0 %v914
    %1964 = vmatpush1.msra.mxu0 %v913
    %1965 = vmatprep.subr.mxu0 %v922
    %1966 = vmatpush1.msra.mxu0 %v921
    %1967 = vmatprep.subr.mxu0 %v930
    %1968 = vmatpush1.msra.mxu0 %v929
    %1969 = vmatprep.subr.mxu0 %v938
    %1970 = vmatpush1.msra.mxu0 %v937
    %1971 = vmatprep.subr.mxu0 %v946
    %1972 = vmatpush1.msra.mxu0 %v945
    %1973 = vmatprep.subr.mxu0 %v954
    %1974 = vmatpush1.msra.mxu0 %v953
    %1975 = vmatprep.subr.mxu0 %v962
    %1976 = vmatpush1.msra.mxu0 %v961
    %1977 = vmatprep.subr.mxu0 %v970
    %1978 = vmatpush1.msra.mxu0 %v969
    %1979 = vmatprep.subr.mxu0 %v978
    %1980 = vmatpush1.msra.mxu0 %v977
    %1981 = vmatprep.subr.mxu0 %v986
    %1982 = vmatpush1.msra.mxu0 %v985
    %1983 = vmatprep.subr.mxu0 %v994
    %1984 = vmatpush1.msra.mxu0 %v993
    %1985 = vmatprep.subr.mxu0 %v1002
    %1986 = vmatpush1.msra.mxu0 %v1001
    %1987 = vmatprep.subr.mxu0 %v1010
    %1988 = vmatpush1.msra.mxu0 %v1009
    %1989 = vmatprep.subr.mxu0 %v1018
    %1990 = vmatpush1.msra.mxu0 %v1017
    %1991 = vmatprep.subr.mxu0 %v1026
    %1992 = vmatpush1.msra.mxu0 %v1025
    %1993 = vmatprep.subr.mxu0 %v1034
    %1994 = vmatpush1.msra.mxu0 %v1033
    %1995 = vmatprep.subr.mxu0 %v1042
    %1996 = vmatpush1.msra.mxu0 %v1041
    %1997 = vmatprep.subr.mxu0 %v1050
    %1998 = vmatpush1.msra.mxu0 %v1049
    %1999 = vmatprep.subr.mxu0 %v1058
    %2000 = vmatpush1.msra.mxu0 %v1057
    %2001 = vmatprep.subr.mxu0 %v1066
    %2002 = vmatpush1.msra.mxu0 %v1065
    %2003 = vmatprep.subr.mxu0 %v1074
    %2004 = vmatpush1.msra.mxu0 %v1073
    %2005 = vmatprep.mubr.f32.mxu0 %v1110
    %2006 = vmatmul.mubr.f32.gmra.mrb[0].mxu0 %v1106
    %v2007 = vpop.f32.mrb[0].mxu0
    %v2008 = vadd.f32 %v1937, %v2007
    %v2009 = vpop.f32.mrb[0].mxu0
    %v2010 = vadd.f32 %v1939, %v2009
    %2011 = vdwg.mxu0
    %2012 = vmatprep.subr.mxu0 %v60
    %2013 = vmatpush1.msra.mxu0 %v59
    %2014 = vmatprep.subr.mxu0 %v68
    %2015 = vmatpush1.msra.mxu0 %v67
    %2016 = vmatprep.subr.mxu0 %v76
    %2017 = vmatpush1.msra.mxu0 %v75
    %2018 = vmatprep.subr.mxu0 %v84
    %2019 = vmatpush1.msra.mxu0 %v83
    %2020 = vmatprep.subr.mxu0 %v92
    %2021 = vmatpush1.msra.mxu0 %v91
    %2022 = vmatprep.subr.mxu0 %v100
    %2023 = vmatpush1.msra.mxu0 %v99
    %2024 = vmatprep.subr.mxu0 %v108
    %2025 = vmatpush1.msra.mxu0 %v107
    %2026 = vmatprep.subr.mxu0 %v116
    %2027 = vmatpush1.msra.mxu0 %v115
    %2028 = vmatprep.subr.mxu0 %v124
    %2029 = vmatpush1.msra.mxu0 %v123
    %2030 = vmatprep.subr.mxu0 %v132
    %2031 = vmatpush1.msra.mxu0 %v131
    %2032 = vmatprep.subr.mxu0 %v140
    %2033 = vmatpush1.msra.mxu0 %v139
    %2034 = vmatprep.subr.mxu0 %v148
    %2035 = vmatpush1.msra.mxu0 %v147
    %2036 = vmatprep.subr.mxu0 %v156
    %2037 = vmatpush1.msra.mxu0 %v155
    %2038 = vmatprep.subr.mxu0 %v164
    %2039 = vmatpush1.msra.mxu0 %v163
    %2040 = vmatprep.subr.mxu0 %v172
    %2041 = vmatpush1.msra.mxu0 %v171
    %2042 = vmatprep.subr.mxu0 %v180
    %2043 = vmatpush1.msra.mxu0 %v179
    %2044 = vmatprep.subr.mxu0 %v188
    %2045 = vmatpush1.msra.mxu0 %v187
    %2046 = vmatprep.subr.mxu0 %v196
    %2047 = vmatpush1.msra.mxu0 %v195
    %2048 = vmatprep.subr.mxu0 %v204
    %2049 = vmatpush1.msra.mxu0 %v203
    %2050 = vmatprep.subr.mxu0 %v212
    %2051 = vmatpush1.msra.mxu0 %v211
    %2052 = vmatprep.subr.mxu0 %v220
    %2053 = vmatpush1.msra.mxu0 %v219
    %2054 = vmatprep.subr.mxu0 %v228
    %2055 = vmatpush1.msra.mxu0 %v227
    %2056 = vmatprep.subr.mxu0 %v236
    %2057 = vmatpush1.msra.mxu0 %v235
    %2058 = vmatprep.subr.mxu0 %v244
    %2059 = vmatpush1.msra.mxu0 %v243
    %2060 = vmatprep.subr.mxu0 %v252
    %2061 = vmatpush1.msra.mxu0 %v251
    %2062 = vmatprep.subr.mxu0 %v260
    %2063 = vmatpush1.msra.mxu0 %v259
    %2064 = vmatprep.subr.mxu0 %v268
    %2065 = vmatpush1.msra.mxu0 %v267
    %2066 = vmatprep.subr.mxu0 %v276
    %2067 = vmatpush1.msra.mxu0 %v275
    %2068 = vmatprep.subr.mxu0 %v284
    %2069 = vmatpush1.msra.mxu0 %v283
    %2070 = vmatprep.subr.mxu0 %v292
    %2071 = vmatpush1.msra.mxu0 %v291
    %2072 = vmatprep.subr.mxu0 %v300
    %2073 = vmatpush1.msra.mxu0 %v299
    %2074 = vmatprep.subr.mxu0 %v308
    %2075 = vmatpush1.msra.mxu0 %v307
    %2076 = vmatprep.mubr.f32.mxu0 %v1086
    %2077 = vmatmul.mubr.f32.gmra.mrb[0].mxu0 %v1082
    %v2078 = vpop.f32.mrb[0].mxu0
    %v2079 = vadd.f32 %v1147, %v2078
    %v2080 = vpop.f32.mrb[0].mxu0
    %v2081 = vadd.f32 %v1151, %v2080
    %2082 = vdwg.mxu0
    %2083 = vmatprep.subr.mxu0 %v316
    %2084 = vmatpush1.msra.mxu0 %v315
    %2085 = vmatprep.subr.mxu0 %v324
    %2086 = vmatpush1.msra.mxu0 %v323
    %2087 = vmatprep.subr.mxu0 %v332
    %2088 = vmatpush1.msra.mxu0 %v331
    %2089 = vmatprep.subr.mxu0 %v340
    %2090 = vmatpush1.msra.mxu0 %v339
    %2091 = vmatprep.subr.mxu0 %v348
    %2092 = vmatpush1.msra.mxu0 %v347
    %2093 = vmatprep.subr.mxu0 %v356
    %2094 = vmatpush1.msra.mxu0 %v355
    %2095 = vmatprep.subr.mxu0 %v364
    %2096 = vmatpush1.msra.mxu0 %v363
    %2097 = vmatprep.subr.mxu0 %v372
    %2098 = vmatpush1.msra.mxu0 %v371
    %2099 = vmatprep.subr.mxu0 %v380
    %2100 = vmatpush1.msra.mxu0 %v379
    %2101 = vmatprep.subr.mxu0 %v388
    %2102 = vmatpush1.msra.mxu0 %v387
    %2103 = vmatprep.subr.mxu0 %v396
    %2104 = vmatpush1.msra.mxu0 %v395
    %2105 = vmatprep.subr.mxu0 %v404
    %2106 = vmatpush1.msra.mxu0 %v403
    %2107 = vmatprep.subr.mxu0 %v412
    %2108 = vmatpush1.msra.mxu0 %v411
    %2109 = vmatprep.subr.mxu0 %v420
    %2110 = vmatpush1.msra.mxu0 %v419
    %2111 = vmatprep.subr.mxu0 %v428
    %2112 = vmatpush1.msra.mxu0 %v427
    %2113 = vmatprep.subr.mxu0 %v436
    %2114 = vmatpush1.msra.mxu0 %v435
    %2115 = vmatprep.subr.mxu0 %v444
    %2116 = vmatpush1.msra.mxu0 %v443
    %2117 = vmatprep.subr.mxu0 %v452
    %2118 = vmatpush1.msra.mxu0 %v451
    %2119 = vmatprep.subr.mxu0 %v460
    %2120 = vmatpush1.msra.mxu0 %v459
    %2121 = vmatprep.subr.mxu0 %v468
    %2122 = vmatpush1.msra.mxu0 %v467
    %2123 = vmatprep.subr.mxu0 %v476
    %2124 = vmatpush1.msra.mxu0 %v475
    %2125 = vmatprep.subr.mxu0 %v484
    %2126 = vmatpush1.msra.mxu0 %v483
    %2127 = vmatprep.subr.mxu0 %v492
    %2128 = vmatpush1.msra.mxu0 %v491
    %2129 = vmatprep.subr.mxu0 %v500
    %2130 = vmatpush1.msra.mxu0 %v499
    %2131 = vmatprep.subr.mxu0 %v508
    %2132 = vmatpush1.msra.mxu0 %v507
    %2133 = vmatprep.subr.mxu0 %v516
    %2134 = vmatpush1.msra.mxu0 %v515
    %2135 = vmatprep.subr.mxu0 %v524
    %2136 = vmatpush1.msra.mxu0 %v523
    %2137 = vmatprep.subr.mxu0 %v532
    %2138 = vmatpush1.msra.mxu0 %v531
    %2139 = vmatprep.subr.mxu0 %v540
    %2140 = vmatpush1.msra.mxu0 %v539
    %2141 = vmatprep.subr.mxu0 %v548
    %2142 = vmatpush1.msra.mxu0 %v547
    %2143 = vmatprep.subr.mxu0 %v556
    %2144 = vmatpush1.msra.mxu0 %v555
    %2145 = vmatprep.subr.mxu0 %v564
    %2146 = vmatpush1.msra.mxu0 %v563
    %2147 = vmatprep.mubr.f32.mxu0 %v1094
    %2148 = vmatmul.mubr.f32.gmra.mrb[0].mxu0 %v1090
    %v2149 = vpop.f32.mrb[0].mxu0
    %v2150 = vadd.f32 %v2079, %v2149
    %v2151 = vpop.f32.mrb[0].mxu0
    %v2152 = vadd.f32 %v2081, %v2151
    %2153 = vdwg.mxu0
    %2154 = vmatprep.subr.mxu0 %v572
    %2155 = vmatpush1.msra.mxu0 %v571
    %2156 = vmatprep.subr.mxu0 %v580
    %2157 = vmatpush1.msra.mxu0 %v579
    %2158 = vmatprep.subr.mxu0 %v588
    %2159 = vmatpush1.msra.mxu0 %v587
    %2160 = vmatprep.subr.mxu0 %v596
    %2161 = vmatpush1.msra.mxu0 %v595
    %2162 = vmatprep.subr.mxu0 %v604
    %2163 = vmatpush1.msra.mxu0 %v603
    %2164 = vmatprep.subr.mxu0 %v612
    %2165 = vmatpush1.msra.mxu0 %v611
    %2166 = vmatprep.subr.mxu0 %v620
    %2167 = vmatpush1.msra.mxu0 %v619
    %2168 = vmatprep.subr.mxu0 %v628
    %2169 = vmatpush1.msra.mxu0 %v627
    %2170 = vmatprep.subr.mxu0 %v636
    %2171 = vmatpush1.msra.mxu0 %v635
    %2172 = vmatprep.subr.mxu0 %v644
    %2173 = vmatpush1.msra.mxu0 %v643
    %2174 = vmatprep.subr.mxu0 %v652
    %2175 = vmatpush1.msra.mxu0 %v651
    %2176 = vmatprep.subr.mxu0 %v660
    %2177 = vmatpush1.msra.mxu0 %v659
    %2178 = vmatprep.subr.mxu0 %v668
    %2179 = vmatpush1.msra.mxu0 %v667
    %2180 = vmatprep.subr.mxu0 %v676
    %2181 = vmatpush1.msra.mxu0 %v675
    %2182 = vmatprep.subr.mxu0 %v684
    %2183 = vmatpush1.msra.mxu0 %v683
    %2184 = vmatprep.subr.mxu0 %v692
    %2185 = vmatpush1.msra.mxu0 %v691
    %2186 = vmatprep.subr.mxu0 %v700
    %2187 = vmatpush1.msra.mxu0 %v699
    %2188 = vmatprep.subr.mxu0 %v708
    %2189 = vmatpush1.msra.mxu0 %v707
    %2190 = vmatprep.subr.mxu0 %v716
    %2191 = vmatpush1.msra.mxu0 %v715
    %2192 = vmatprep.subr.mxu0 %v724
    %2193 = vmatpush1.msra.mxu0 %v723
    %2194 = vmatprep.subr.mxu0 %v732
    %2195 = vmatpush1.msra.mxu0 %v731
    %2196 = vmatprep.subr.mxu0 %v740
    %2197 = vmatpush1.msra.mxu0 %v739
    %2198 = vmatprep.subr.mxu0 %v748
    %2199 = vmatpush1.msra.mxu0 %v747
    %2200 = vmatprep.subr.mxu0 %v756
    %2201 = vmatpush1.msra.mxu0 %v755
    %2202 = vmatprep.subr.mxu0 %v764
    %2203 = vmatpush1.msra.mxu0 %v763
    %2204 = vmatprep.subr.mxu0 %v772
    %2205 = vmatpush1.msra.mxu0 %v771
    %2206 = vmatprep.subr.mxu0 %v780
    %2207 = vmatpush1.msra.mxu0 %v779
    %2208 = vmatprep.subr.mxu0 %v788
    %2209 = vmatpush1.msra.mxu0 %v787
    %2210 = vmatprep.subr.mxu0 %v796
    %2211 = vmatpush1.msra.mxu0 %v795
    %2212 = vmatprep.subr.mxu0 %v804
    %2213 = vmatpush1.msra.mxu0 %v803
    %2214 = vmatprep.subr.mxu0 %v812
    %2215 = vmatpush1.msra.mxu0 %v811
    %2216 = vmatprep.subr.mxu0 %v820
    %2217 = vmatpush1.msra.mxu0 %v819
    %2218 = vmatprep.mubr.f32.mxu0 %v1102
    %2219 = vmatmul.mubr.f32.gmra.mrb[0].mxu0 %v1098
    %v2220 = vpop.f32.mrb[0].mxu0
    %v2221 = vadd.f32 %v2150, %v2220
    %v2222 = vpop.f32.mrb[0].mxu0
    %v2223 = vadd.f32 %v2152, %v2222
    %2224 = vdwg.mxu0
    %2225 = vmatprep.subr.mxu0 %v828
    %2226 = vmatpush1.msra.mxu0 %v827
    %2227 = vmatprep.subr.mxu0 %v836
    %2228 = vmatpush1.msra.mxu0 %v835
    %2229 = vmatprep.subr.mxu0 %v844
    %2230 = vmatpush1.msra.mxu0 %v843
    %2231 = vmatprep.subr.mxu0 %v852
    %2232 = vmatpush1.msra.mxu0 %v851
    %2233 = vmatprep.subr.mxu0 %v860
    %2234 = vmatpush1.msra.mxu0 %v859
    %2235 = vmatprep.subr.mxu0 %v868
    %2236 = vmatpush1.msra.mxu0 %v867
    %2237 = vmatprep.subr.mxu0 %v876
    %2238 = vmatpush1.msra.mxu0 %v875
    %2239 = vmatprep.subr.mxu0 %v884
    %2240 = vmatpush1.msra.mxu0 %v883
    %2241 = vmatprep.subr.mxu0 %v892
    %2242 = vmatpush1.msra.mxu0 %v891
    %2243 = vmatprep.subr.mxu0 %v900
    %2244 = vmatpush1.msra.mxu0 %v899
    %2245 = vmatprep.subr.mxu0 %v908
    %2246 = vmatpush1.msra.mxu0 %v907
    %2247 = vmatprep.subr.mxu0 %v916
    %2248 = vmatpush1.msra.mxu0 %v915
    %2249 = vmatprep.subr.mxu0 %v924
    %2250 = vmatpush1.msra.mxu0 %v923
    %2251 = vmatprep.subr.mxu0 %v932
    %2252 = vmatpush1.msra.mxu0 %v931
    %2253 = vmatprep.subr.mxu0 %v940
    %2254 = vmatpush1.msra.mxu0 %v939
    %2255 = vmatprep.subr.mxu0 %v948
    %2256 = vmatpush1.msra.mxu0 %v947
    %2257 = vmatprep.subr.mxu0 %v956
    %2258 = vmatpush1.msra.mxu0 %v955
    %2259 = vmatprep.subr.mxu0 %v964
    %2260 = vmatpush1.msra.mxu0 %v963
    %2261 = vmatprep.subr.mxu0 %v972
    %2262 = vmatpush1.msra.mxu0 %v971
    %2263 = vmatprep.subr.mxu0 %v980
    %2264 = vmatpush1.msra.mxu0 %v979
    %2265 = vmatprep.subr.mxu0 %v988
    %2266 = vmatpush1.msra.mxu0 %v987
    %2267 = vmatprep.subr.mxu0 %v996
    %2268 = vmatpush1.msra.mxu0 %v995
    %2269 = vmatprep.subr.mxu0 %v1004
    %2270 = vmatpush1.msra.mxu0 %v1003
    %2271 = vmatprep.subr.mxu0 %v1012
    %2272 = vmatpush1.msra.mxu0 %v1011
    %2273 = vmatprep.subr.mxu0 %v1020
    %2274 = vmatpush1.msra.mxu0 %v1019
    %2275 = vmatprep.subr.mxu0 %v1028
    %2276 = vmatpush1.msra.mxu0 %v1027
    %2277 = vmatprep.subr.mxu0 %v1036
    %2278 = vmatpush1.msra.mxu0 %v1035
    %2279 = vmatprep.subr.mxu0 %v1044
    %2280 = vmatpush1.msra.mxu0 %v1043
    %2281 = vmatprep.subr.mxu0 %v1052
    %2282 = vmatpush1.msra.mxu0 %v1051
    %2283 = vmatprep.subr.mxu0 %v1060
    %2284 = vmatpush1.msra.mxu0 %v1059
    %2285 = vmatprep.subr.mxu0 %v1068
    %2286 = vmatpush1.msra.mxu0 %v1067
    %2287 = vmatprep.subr.mxu0 %v1076
    %2288 = vmatpush1.msra.mxu0 %v1075
    %2289 = vmatprep.mubr.f32.mxu0 %v1110
    %2290 = vmatmul.mubr.f32.gmra.mrb[0].mxu0 %v1106
    %v2291 = vpop.f32.mrb[0].mxu0
    %v2292 = vadd.f32 %v2221, %v2291
    %v2293 = vpop.f32.mrb[0].mxu0
    %v2294 = vadd.f32 %v2223, %v2293
    %2295 = vdwg.mxu0
    %v2304 = vcombine.low %v1440, %v1442
    %v2305 = vcombine.low %v1724, %v1726
    %v2306 = vcombine.low %v2008, %v2010
    %v2307 = vcombine.low %v2292, %v2294
    %v2309 = vunpack.c.l.s4 1966171168
    %v2310 = vunpack.c.0.s8 %v2309
    %v2311 = vlaneseq
    %v2312 = vshrl.u32 %v2311, 7
    %v2313 = vsub.s32 %v2310, %v2312
    %v2314 = vrot.slane %v2304, %v2313
    %v2316 = vunpack.c.l.s4 1966171168
    %v2317 = vunpack.c.0.s8 %v2316
    %v2318 = vlaneseq
    %v2319 = vshrl.u32 %v2318, 7
    %v2320 = vsub.s32 %v2317, %v2319
    %v2321 = vrot.slane %v2305, %v2320
    %v2323 = vunpack.c.l.s4 1966171168
    %v2324 = vunpack.c.0.s8 %v2323
    %v2325 = vlaneseq
    %v2326 = vshrl.u32 %v2325, 7
    %v2327 = vsub.s32 %v2324, %v2326
    %v2328 = vrot.slane %v2306, %v2327
    %v2330 = vunpack.c.l.s4 1966171168
    %v2331 = vunpack.c.0.s8 %v2330
    %v2332 = vlaneseq
    %v2333 = vshrl.u32 %v2332, 7
    %v2334 = vsub.s32 %v2331, %v2333
    %v2335 = vrot.slane %v2307, %v2334
    %v2336 = vcombine.low %v2314, %v2321
    %v2337 = vcombine.low %v2328, %v2335
    %v2339 = vunpack.c.l.s4 1966171168
    %v2340 = vunpack.c.0.s8 %v2339
    %v2341 = vlaneseq
    %v2342 = vshrl.u32 %v2341, 7
    %v2343 = vsub.s32 %v2340, %v2342
    %v2344 = vrot.slane %v2336, %v2343
    %v2346 = vunpack.c.l.s4 1966171168
    %v2347 = vunpack.c.0.s8 %v2346
    %v2348 = vlaneseq
    %v2349 = vshrl.u32 %v2348, 7
    %v2350 = vsub.s32 %v2347, %v2349
    %v2351 = vrot.slane %v2337, %v2350
    %v2352 = vcombine.low %v2344, %v2351
    %2354 = vst [vmem:[#allocation8] sm:$0xff] %v2352
    // Predicated region
    $region26: #{tpu_custom_call.1} parent=1 // pred_check
      _
    $region27: #{tpu_custom_call.1} parent=1 // pred_check_branch
      %2356 = sbr.rel (0) target = $region29
    $region28: #{tpu_custom_call.1} parent=1 // pred_region
      %s2358 = ssub.s32 128, 128
      %2359 = vsyncadd [#allocation4], %s2358
      %s2361 = sshll.u32 [#allocation8], 4
      %s2362 = int_to_ptr.vmem [resolvable:$true] %s2361
      %2364 = dma.vmem_to_hbm [thread:$0]  %s2362, 128, %s3, [#allocation4]
    $region29: #{tpu_custom_call.1} parent=1 // pred_fallthru
      _
    // Predicated region
    $region30: #{tpu_custom_call.1} parent=1 // pred_check
      _
    $region31: #{tpu_custom_call.1} parent=1 // pred_check_branch
      %2366 = sbr.rel (0) target = $region33
    $region32: #{tpu_custom_call.1} parent=1 // pred_region
      %2367 = dma.done [#allocation4], 128
    $region33: #{tpu_custom_call.1} parent=1 // pred_fallthru
      _
    %2368 = vsyncpa [#allocation3], 1
    %2369 = vsyncpa [#allocation6], 1
    %2370 = vsyncpa [#allocation4], 1

</llo_original>
